<compile_context>
chip_gen: v6e
topology: v6e:2x2x1
jax: 0.10.0
libtpu: 0.0.40
codegen_flags: <defaults>
</compile_context>

<pallas_src>
import functools

import jax
import jax.numpy as jnp
from jax.experimental import pallas as pl
from jax.experimental.pallas import tpu as pltpu


def _round_up(x, m):
    return (x + m - 1) // m * m


def _relu_im2col_matmul(x_ref, w_ref, lhs_ref, *, kh, kw, stride, h_out, w_out,
                        compute_dtype):
    """ReLU -> build im2col LHS once in VMEM scratch -> ONE MXU matmul.

    x_ref:   (1, H_pad, W_pad, C_in)     zero-padded NHWC input tile (one image)
    w_ref:   (kh*kw*C_in, C_mx)          im2col weight (output channels lane-padded)
    lhs_ref: (h_out, w_out, kh*kw*C_in)  VMEM scratch for the im2col LHS
    returns  (h_out*w_out, C_mx) float32 conv output for this image.
    """
    # ReLU + single cast, hoisted out of the tap loop (ReLU(0)==0 commutes with zero-pad).
    x = jnp.maximum(x_ref[0], 0.0).astype(compute_dtype)
    c_in = x.shape[-1]
    for i in range(kh):
        for j in range(kw):
            if stride == 1:
                win = x[i:i + h_out, j:j + w_out, :]
            else:
                win = x[i:i + (h_out - 1) * stride + 1:stride,
                        j:j + (w_out - 1) * stride + 1:stride, :]
            t = i * kw + j
            lhs_ref[:, :, t * c_in:(t + 1) * c_in] = win
    lhs = lhs_ref[...].reshape(h_out * w_out, kh * kw * c_in)
    # Single matmul, K = kh*kw*C_in; accumulation stays in the MXU result buffer (f32).
    return jnp.dot(lhs, w_ref[...], preferred_element_type=jnp.float32)


def _stats_kernel(x_ref, w_ref, s_ref, q_ref, lhs_ref, *, conv):
    # Pass 1: per-image per-channel sum / sum-of-squares from the f32 accumulator
    # (stats taken BEFORE any downcast; the conv intermediate never goes to HBM).
    acc = conv(x_ref, w_ref, lhs_ref)                      # (Mb, C_mx) f32
    s = jnp.sum(acc, axis=0, keepdims=True)                # (1, C_mx)
    q = jnp.sum(acc * acc, axis=0, keepdims=True)
    s_ref[0] = jnp.broadcast_to(s, s_ref.shape[1:])
    q_ref[0] = jnp.broadcast_to(q, q_ref.shape[1:])


def _conv_bn_kernel(x_ref, w_ref, scale_ref, bias_ref, o_ref, lhs_ref, *, conv, c_out):
    # Pass 2: recompute conv, apply folded BN, emit NCHW-flat (C_out, H_out*W_out)
    # directly (lane dim = H_out*W_out -> lane-dense stores, no channel padding in HBM).
    acc = conv(x_ref, w_ref, lhs_ref)                      # (Mb, C_mx) f32
    y = acc * scale_ref[...] + bias_ref[...]               # scale/bias fold mean,var,gamma,beta
    yt = y.T                                               # (C_mx, Mb), tile-aligned transpose
    o_ref[0] = yt[:c_out, :].astype(o_ref.dtype)


def relu_conv_bn(x, weight, gamma, beta, *, stride, padding, eps=1e-5,
                 compute_dtype=jnp.float32):
    """x: (N, C_in, H, W) f32; weight: (C_out, C_in, kh, kw); gamma/beta: (C_out,)."""
    N, C_in, H, W = x.shape
    C_out, _, kh, kw = weight.shape
    H_out = (H + 2 * padding - kh) // stride + 1
    W_out = (W + 2 * padding - kw) // stride + 1
    H_pad, W_pad = H + 2 * padding, W + 2 * padding
    Mb = H_out * W_out
    M = N * Mb
    K = kh * kw * C_in
    C_mx = _round_up(C_out, 128)   # lane width only for the tiny weight/scale/bias/stats

    # Glue: NCHW -> NHWC (channels minor) + spatial zero-pad; read once per pass.
    xp = jnp.pad(jnp.transpose(x, (0, 2, 3, 1)).astype(jnp.float32),
                 ((0, 0), (padding, padding), (padding, padding), (0, 0)))
    # weight (C_out, C_in, kh, kw) -> im2col RHS (kh*kw*C_in, C_mx), K order = (i, j, ci).
    w2 = jnp.transpose(weight, (2, 3, 1, 0)).reshape(K, C_out)
    w2 = jnp.pad(w2, ((0, 0), (0, C_mx - C_out))).astype(compute_dtype)

    conv = functools.partial(_relu_im2col_matmul, kh=kh, kw=kw, stride=stride,
                             h_out=H_out, w_out=W_out, compute_dtype=compute_dtype)

    x_spec = pl.BlockSpec((1, H_pad, W_pad, C_in), lambda b: (b, 0, 0, 0))
    w_spec = pl.BlockSpec((K, C_mx), lambda b: (0, 0))
    scratch = [pltpu.VMEM((H_out, W_out, K), compute_dtype)]
    itemsize = jnp.dtype(compute_dtype).itemsize

    # TODO(synk): for large spatial extents (or N==1 on v7x's two TensorCores) add an
    # H_out tile axis with a (kh-1)-row halo so per-step VMEM stays bounded and both
    # cores get "parallel" work; not needed at these shapes.

    # ---- Pass 1: stats only (no f32 conv intermediate in HBM) --------------------------
    psum, psumsq = pl.pallas_call(
        functools.partial(_stats_kernel, conv=conv),
        out_shape=(jax.ShapeDtypeStruct((N, 8, C_mx), jnp.float32),
                   jax.ShapeDtypeStruct((N, 8, C_mx), jnp.float32)),
        grid=(N,),
        in_specs=[x_spec, w_spec],
        out_specs=(pl.BlockSpec((1, 8, C_mx), lambda b: (b, 0, 0)),
                   pl.BlockSpec((1, 8, C_mx), lambda b: (b, 0, 0))),
        scratch_shapes=scratch,
        compiler_params=pltpu.CompilerParams(dimension_semantics=("parallel",)),
        cost_estimate=pl.CostEstimate(
            flops=2 * M * K * C_mx, transcendentals=0,
            bytes_accessed=xp.size * 4 + w2.size * itemsize + 2 * N * 8 * C_mx * 4),
    )(xp, w2)

    # Tiny reductions: fold train-mode batch stats + affine into per-channel scale/bias.
    total = jnp.sum(psum[:, 0, :C_out], axis=0)
    totsq = jnp.sum(psumsq[:, 0, :C_out], axis=0)
    mean = total / M
    var = jnp.maximum(totsq / M - mean * mean, 0.0)         # biased variance (train-mode BN)
    scale = gamma.astype(jnp.float32) * jax.lax.rsqrt(var + eps)
    bias = beta.astype(jnp.float32) - mean * scale
    scale_p = jnp.pad(scale, (0, C_mx - C_out)).reshape(1, C_mx)
    bias_p = jnp.pad(bias, (0, C_mx - C_out)).reshape(1, C_mx)
    # TODO(synk): BatchNorm2d running_mean/running_var buffer updates (a training-time
    # side effect of the PyTorch module, not part of its forward return) are not emitted.

    # ---- Pass 2: conv recompute fused with BN apply, NCHW-flat emit --------------------
    out = pl.pallas_call(
        functools.partial(_conv_bn_kernel, conv=conv, c_out=C_out),
        out_shape=jax.ShapeDtypeStruct((N, C_out, Mb), jnp.float32),
        grid=(N,),
        in_specs=[x_spec, w_spec,
                  pl.BlockSpec((1, C_mx), lambda b: (0, 0)),
                  pl.BlockSpec((1, C_mx), lambda b: (0, 0))],
        out_specs=pl.BlockSpec((1, C_out, Mb), lambda b: (b, 0, 0)),
        scratch_shapes=scratch,
        compiler_params=pltpu.CompilerParams(dimension_semantics=("parallel",)),
        cost_estimate=pl.CostEstimate(
            flops=2 * M * K * C_mx + 2 * M * C_mx, transcendentals=0,
            bytes_accessed=xp.size * 4 + w2.size * itemsize + 2 * C_mx * 4
                           + N * C_out * Mb * 4),
    )(xp, w2, scale_p, bias_p)

    # Final layout already NCHW-flat; this reshape is free (metadata only).
    return out.reshape(N, C_out, H_out, W_out)


def _reference(x, weight, gamma, beta, *, stride, padding, eps=1e-5):
    # Pure-JAX reference (ReLU -> conv -> train-mode BN) for sanity checking.
    r = jnp.maximum(x, 0.0)
    y = jax.lax.conv_general_dilated(
        r, weight, window_strides=(stride, stride),
        padding=[(padding, padding), (padding, padding)],
        dimension_numbers=("NCHW", "OIHW", "NCHW"))
    mean = jnp.mean(y, axis=(0, 2, 3), keepdims=True)
    var = jnp.mean((y - mean) ** 2, axis=(0, 2, 3), keepdims=True)
    return (y - mean) * jax.lax.rsqrt(var + eps) * gamma[None, :, None, None] \
        + beta[None, :, None, None]


if __name__ == "__main__":
    # ReLUConvBN(C_in=4, C_out=8, kernel_size=3, stride=1, padding=1, affine=True)
    N, C_in, C_out, H, W = 2, 4, 8, 16, 16
    kh = kw = 3
    stride, padding = 1, 1

    key = jax.random.PRNGKey(0)
    kx, kw_key = jax.random.split(key)
    x = jax.random.normal(kx, (N, C_in, H, W), dtype=jnp.float32)
    weight = 0.1 * jax.random.normal(kw_key, (C_out, C_in, kh, kw), dtype=jnp.float32)
    gamma = jnp.ones((C_out,), dtype=jnp.float32)   # BatchNorm2d default affine init
    beta = jnp.zeros((C_out,), dtype=jnp.float32)

    ref = _reference(x, weight, gamma, beta, stride=stride, padding=padding)

    # f32 compute path: tight correctness check against the f32 reference.
    out_f32 = relu_conv_bn(x, weight, gamma, beta, stride=stride, padding=padding,
                           compute_dtype=jnp.float32)
    out_f32 = jax.block_until_ready(out_f32)
    assert out_f32.shape == (N, C_out, H, W)
    assert jnp.allclose(out_f32, ref, atol=5e-4, rtol=5e-4), \
        float(jnp.max(jnp.abs(out_f32 - ref)))

    # bf16 MXU-operand path (ReLU / stats / BN apply stay f32; f32 accumulation).
    out_bf16 = relu_conv_bn(x, weight, gamma, beta, stride=stride, padding=padding,
                            compute_dtype=jnp.bfloat16)
    out_bf16 = jax.block_until_ready(out_bf16)
    assert out_bf16.shape == (N, C_out, H, W)
    assert jnp.allclose(out_bf16, ref, atol=3e-2, rtol=3e-2), \
        float(jnp.max(jnp.abs(out_bf16 - ref)))

    print("KERNEL_OK")
</pallas_src>

<mosaic_0001>
module attributes {stable_mosaic.version = 11 : i64} {
  func.func @_stats_kernel(%arg0: i32, %arg1: memref<1x18x18x4xf32, #tpu.memory_space<vmem>>, %arg2: memref<36x128xf32, #tpu.memory_space<vmem>>, %arg3: memref<1x8x128xf32, #tpu.memory_space<vmem>>, %arg4: memref<1x8x128xf32, #tpu.memory_space<vmem>>, %arg5: memref<16x16x36xf32, #tpu.memory_space<vmem>>) attributes {dimension_semantics = [#tpu.dimension_semantics<parallel>], iteration_bounds = array<i64: 2>, scalar_prefetch = 0 : i64, scratch_operands = 1 : i64, tpu.core_type = #tpu.core_type<tc>, window_params = [{transform_indices = @transform_0, window_bounds = array<i64: 1, 18, 18, 4>}, {pipeline_mode = #tpu.pipeline_mode<synchronous>, transform_indices = @transform_1, window_bounds = array<i64: 36, 128>}, {transform_indices = @transform_2, window_bounds = array<i64: 1, 8, 128>}, {transform_indices = @transform_3, window_bounds = array<i64: 1, 8, 128>}]} {
    %c0 = arith.constant 0 : index
    %c0_0 = arith.constant 0 : index
    %c0_1 = arith.constant 0 : index
    %c0_2 = arith.constant 0 : index
    %0 = vector.load %arg1[%c0, %c0_0, %c0_1, %c0_2] : memref<1x18x18x4xf32, #tpu.memory_space<vmem>>, vector<1x18x18x4xf32>
    %1 = vector.shape_cast %0 : vector<1x18x18x4xf32> to vector<18x18x4xf32>
    %cst = arith.constant 0.000000e+00 : f32
    %2 = vector.broadcast %cst : f32 to vector<18x18x4xf32>
    %3 = arith.maximumf %1, %2 : vector<18x18x4xf32>
    %4 = vector.extract_strided_slice %3 {offsets = [0, 0, 0], sizes = [16, 16, 4], strides = [1, 1, 1]} : vector<18x18x4xf32> to vector<16x16x4xf32>
    %c0_3 = arith.constant 0 : index
    %c0_4 = arith.constant 0 : index
    %c0_5 = arith.constant 0 : index
    %5 = vector.load %arg5[%c0_3, %c0_4, %c0_5] : memref<16x16x36xf32, #tpu.memory_space<vmem>>, vector<16x16x4xf32>
    tpu.vector_store %arg5[%c0_3, %c0_4, %c0_5], %4 {strides = array<i32>} : memref<16x16x36xf32, #tpu.memory_space<vmem>>, vector<16x16x4xf32>,
    %6 = vector.extract_strided_slice %3 {offsets = [0, 1, 0], sizes = [16, 16, 4], strides = [1, 1, 1]} : vector<18x18x4xf32> to vector<16x16x4xf32>
    %c0_6 = arith.constant 0 : index
    %c0_7 = arith.constant 0 : index
    %c4 = arith.constant 4 : index
    %7 = vector.load %arg5[%c0_6, %c0_7, %c4] : memref<16x16x36xf32, #tpu.memory_space<vmem>>, vector<16x16x4xf32>
    tpu.vector_store %arg5[%c0_6, %c0_7, %c4], %6 {strides = array<i32>} : memref<16x16x36xf32, #tpu.memory_space<vmem>>, vector<16x16x4xf32>,
    %8 = vector.extract_strided_slice %3 {offsets = [0, 2, 0], sizes = [16, 16, 4], strides = [1, 1, 1]} : vector<18x18x4xf32> to vector<16x16x4xf32>
    %c0_8 = arith.constant 0 : index
    %c0_9 = arith.constant 0 : index
    %c8 = arith.constant 8 : index
    %9 = vector.load %arg5[%c0_8, %c0_9, %c8] : memref<16x16x36xf32, #tpu.memory_space<vmem>>, vector<16x16x4xf32>
    tpu.vector_store %arg5[%c0_8, %c0_9, %c8], %8 {strides = array<i32>} : memref<16x16x36xf32, #tpu.memory_space<vmem>>, vector<16x16x4xf32>,
    %10 = vector.extract_strided_slice %3 {offsets = [1, 0, 0], sizes = [16, 16, 4], strides = [1, 1, 1]} : vector<18x18x4xf32> to vector<16x16x4xf32>
    %c0_10 = arith.constant 0 : index
    %c0_11 = arith.constant 0 : index
    %c12 = arith.constant 12 : index
    %11 = vector.load %arg5[%c0_10, %c0_11, %c12] : memref<16x16x36xf32, #tpu.memory_space<vmem>>, vector<16x16x4xf32>
    tpu.vector_store %arg5[%c0_10, %c0_11, %c12], %10 {strides = array<i32>} : memref<16x16x36xf32, #tpu.memory_space<vmem>>, vector<16x16x4xf32>,
    %12 = vector.extract_strided_slice %3 {offsets = [1, 1, 0], sizes = [16, 16, 4], strides = [1, 1, 1]} : vector<18x18x4xf32> to vector<16x16x4xf32>
    %c0_12 = arith.constant 0 : index
    %c0_13 = arith.constant 0 : index
    %c16 = arith.constant 16 : index
    %13 = vector.load %arg5[%c0_12, %c0_13, %c16] : memref<16x16x36xf32, #tpu.memory_space<vmem>>, vector<16x16x4xf32>
    tpu.vector_store %arg5[%c0_12, %c0_13, %c16], %12 {strides = array<i32>} : memref<16x16x36xf32, #tpu.memory_space<vmem>>, vector<16x16x4xf32>,
    %14 = vector.extract_strided_slice %3 {offsets = [1, 2, 0], sizes = [16, 16, 4], strides = [1, 1, 1]} : vector<18x18x4xf32> to vector<16x16x4xf32>
    %c0_14 = arith.constant 0 : index
    %c0_15 = arith.constant 0 : index
    %c20 = arith.constant 20 : index
    %15 = vector.load %arg5[%c0_14, %c0_15, %c20] : memref<16x16x36xf32, #tpu.memory_space<vmem>>, vector<16x16x4xf32>
    tpu.vector_store %arg5[%c0_14, %c0_15, %c20], %14 {strides = array<i32>} : memref<16x16x36xf32, #tpu.memory_space<vmem>>, vector<16x16x4xf32>,
    %16 = vector.extract_strided_slice %3 {offsets = [2, 0, 0], sizes = [16, 16, 4], strides = [1, 1, 1]} : vector<18x18x4xf32> to vector<16x16x4xf32>
    %c0_16 = arith.constant 0 : index
    %c0_17 = arith.constant 0 : index
    %c24 = arith.constant 24 : index
    %17 = vector.load %arg5[%c0_16, %c0_17, %c24] : memref<16x16x36xf32, #tpu.memory_space<vmem>>, vector<16x16x4xf32>
    tpu.vector_store %arg5[%c0_16, %c0_17, %c24], %16 {strides = array<i32>} : memref<16x16x36xf32, #tpu.memory_space<vmem>>, vector<16x16x4xf32>,
    %18 = vector.extract_strided_slice %3 {offsets = [2, 1, 0], sizes = [16, 16, 4], strides = [1, 1, 1]} : vector<18x18x4xf32> to vector<16x16x4xf32>
    %c0_18 = arith.constant 0 : index
    %c0_19 = arith.constant 0 : index
    %c28 = arith.constant 28 : index
    %19 = vector.load %arg5[%c0_18, %c0_19, %c28] : memref<16x16x36xf32, #tpu.memory_space<vmem>>, vector<16x16x4xf32>
    tpu.vector_store %arg5[%c0_18, %c0_19, %c28], %18 {strides = array<i32>} : memref<16x16x36xf32, #tpu.memory_space<vmem>>, vector<16x16x4xf32>,
    %20 = vector.extract_strided_slice %3 {offsets = [2, 2, 0], sizes = [16, 16, 4], strides = [1, 1, 1]} : vector<18x18x4xf32> to vector<16x16x4xf32>
    %c0_20 = arith.constant 0 : index
    %c0_21 = arith.constant 0 : index
    %c32 = arith.constant 32 : index
    %21 = vector.load %arg5[%c0_20, %c0_21, %c32] : memref<16x16x36xf32, #tpu.memory_space<vmem>>, vector<16x16x4xf32>
    tpu.vector_store %arg5[%c0_20, %c0_21, %c32], %20 {strides = array<i32>} : memref<16x16x36xf32, #tpu.memory_space<vmem>>, vector<16x16x4xf32>,
    %c0_22 = arith.constant 0 : index
    %c0_23 = arith.constant 0 : index
    %c0_24 = arith.constant 0 : index
    %22 = vector.load %arg5[%c0_22, %c0_23, %c0_24] : memref<16x16x36xf32, #tpu.memory_space<vmem>>, vector<16x16x36xf32>
    %23 = vector.shape_cast %22 : vector<16x16x36xf32> to vector<256x36xf32>
    %c0_25 = arith.constant 0 : index
    %c0_26 = arith.constant 0 : index
    %24 = vector.load %arg2[%c0_25, %c0_26] : memref<36x128xf32, #tpu.memory_space<vmem>>, vector<36x128xf32>
    %cst_27 = arith.constant dense<0.000000e+00> : vector<256x128xf32>
    %25 = tpu.matmul %23, %24, %cst_27 {dimension_numbers = #tpu.dot_dimension_numbers<[1], [0], [0], [1], [0, 0, 1, 1], [], []>} : vector<256x36xf32>, vector<36x128xf32>, vector<256x128xf32> -> vector<256x128xf32>
    %cst_28 = arith.constant dense<0.000000e+00> : vector<128xf32>
    %26 = vector.multi_reduction <add>, %25, %cst_28 [0] : vector<256x128xf32> to vector<128xf32>
    %27 = vector.shape_cast %26 : vector<128xf32> to vector<1x128xf32>
    %28 = arith.mulf %25, %25 : vector<256x128xf32>
    %cst_29 = arith.constant dense<0.000000e+00> : vector<128xf32>
    %29 = vector.multi_reduction <add>, %28, %cst_29 [0] : vector<256x128xf32> to vector<128xf32>
    %30 = vector.shape_cast %29 : vector<128xf32> to vector<1x128xf32>
    %31 = vector.shape_cast %27 : vector<1x128xf32> to vector<1x128xf32>
    %32 = vector.broadcast %31 : vector<1x128xf32> to vector<8x128xf32>
    %c0_30 = arith.constant 0 : index
    %c0_31 = arith.constant 0 : index
    %c0_32 = arith.constant 0 : index
    %33 = vector.load %arg3[%c0_30, %c0_31, %c0_32] : memref<1x8x128xf32, #tpu.memory_space<vmem>>, vector<1x8x128xf32>
    %34 = vector.shape_cast %33 : vector<1x8x128xf32> to vector<8x128xf32>
    %35 = vector.shape_cast %32 : vector<8x128xf32> to vector<1x8x128xf32>
    tpu.vector_store %arg3[%c0_30, %c0_31, %c0_32], %35 {strides = array<i32>} : memref<1x8x128xf32, #tpu.memory_space<vmem>>, vector<1x8x128xf32>,
    %36 = vector.shape_cast %30 : vector<1x128xf32> to vector<1x128xf32>
    %37 = vector.broadcast %36 : vector<1x128xf32> to vector<8x128xf32>
    %c0_33 = arith.constant 0 : index
    %c0_34 = arith.constant 0 : index
    %c0_35 = arith.constant 0 : index
    %38 = vector.load %arg4[%c0_33, %c0_34, %c0_35] : memref<1x8x128xf32, #tpu.memory_space<vmem>>, vector<1x8x128xf32>
    %39 = vector.shape_cast %38 : vector<1x8x128xf32> to vector<8x128xf32>
    %40 = vector.shape_cast %37 : vector<8x128xf32> to vector<1x8x128xf32>
    tpu.vector_store %arg4[%c0_33, %c0_34, %c0_35], %40 {strides = array<i32>} : memref<1x8x128xf32, #tpu.memory_space<vmem>>, vector<1x8x128xf32>,
    return
  }
  func.func @transform_0(%arg0: i32) -> (i32, i32, i32, i32) {
    %c0_i32 = arith.constant 0 : i32
    %c0_i32_0 = arith.constant 0 : i32
    %c0_i32_1 = arith.constant 0 : i32
    %c0_i32_2 = arith.constant 0 : i32
    return %arg0, %c0_i32, %c0_i32_0, %c0_i32_1 : i32, i32, i32, i32
  }
  func.func @transform_1(%arg0: i32) -> (i32, i32) {
    %c0_i32 = arith.constant 0 : i32
    %c0_i32_0 = arith.constant 0 : i32
    %c0_i32_1 = arith.constant 0 : i32
    return %c0_i32, %c0_i32_0 : i32, i32
  }
  func.func @transform_2(%arg0: i32) -> (i32, i32, i32) {
    %c0_i32 = arith.constant 0 : i32
    %c0_i32_0 = arith.constant 0 : i32
    %c0_i32_1 = arith.constant 0 : i32
    return %arg0, %c0_i32, %c0_i32_0 : i32, i32, i32
  }
  func.func @transform_3(%arg0: i32) -> (i32, i32, i32) {
    %c0_i32 = arith.constant 0 : i32
    %c0_i32_0 = arith.constant 0 : i32
    %c0_i32_1 = arith.constant 0 : i32
    return %arg0, %c0_i32, %c0_i32_0 : i32, i32, i32
  }
}

</mosaic_0001>

<llo_original>
// kernel: tpu_custom_call.1
$region0: #{tpu_custom_call.1}
  #allocation0 [shape = 'u32[]', space=smem, size = 0x4, offset = 0x4, fixed_abs, tag = 'smem constant byte address 0x4 - core index']
  #allocation1 [shape = 'u32[144,128]{1,0:T(1,128)}', space=vmem, size = 0x12000, scoped, tag = 'internal scratch']
  #allocation2 [shape = 'f32[16,16,36]{2,1,0:T(8,128)}', space=vmem, size = 0x20000, scoped, tag = 'scratch operand']
  %s0 = inlined_call_operand.vmem [shape: f32[2,18,18,4], index: 0, kind: input, shape index: {}]
  %s1 = inlined_call_operand.vmem [shape: f32[36,128], index: 1, kind: input, shape index: {}]
  %s2 = inlined_call_operand.hbm [shape: f32[2,8,128], index: 2, kind: output, shape index: {0}]
  %s3 = inlined_call_operand.hbm [shape: f32[2,8,128], index: 3, kind: output, shape index: {1}]
  %4 = xla_tuple %s2, %s3
  %s5 = sld [smem:[#allocation0]]
  $region49: #{tpu_custom_call.1} parent=0
    _
  %s7 = ssub.s32 1, %s5
  %s8 = scalar_select 0, %s7, %s5
  $region1: #{tpu_custom_call.1} parent=0
    #allocation3 [shape = 'u8[8192]{0}', space=vmem, size = 0x2000, scoped, tag = 'output window, operand 0']
    #allocation4 [shape = 's32[2]{0}', space=sflag, size = 0x8, scoped, tag = 'scoped memory for tpu_custom_call.1']
    #allocation5 [shape = 'u8[8192]{0}', space=vmem, size = 0x2000, scoped, tag = 'output window, operand 1']
    #allocation6 [shape = 's32[2]{0}', space=sflag, size = 0x8, scoped, tag = 'scoped memory for tpu_custom_call.1']
    %9 = vsyncpa [#allocation4], 0
    %s10 = scalar_lea.sflag [#allocation4], 1
    %11 = vsyncpa %s10, 0
    %12 = vsyncpa [#allocation6], 0
    %s13 = scalar_lea.sflag [#allocation6], 1
    %14 = vsyncpa %s13, 0
    loop: start=0, step=1, limit=4
    $region2: #{tpu_custom_call.1} parent=1 // loop_pre_header
      _
    $region3: #{tpu_custom_call.1} parent=1 // loop_header
      %s16 = sphi 0, %s20
      %p17 = scmp.ge.s32.totalorder %s16, 4
      %s26 = sphi 0, %s28
      %s29 = sphi 0, %s26
      %s30 = sphi 0, %s29
      %s46 = sphi 0, %s30
      %s50 = sphi 0, %s50
      %s52 = sphi 0, %s50
      %s53 = sphi 0, %s52
      %s67 = sphi 0, %s53
      %s73 = sphi 0, %s75
      %s76 = sphi 0, %s73
      %s77 = sphi 0, %s76
      %s93 = sphi 0, %s77
      %s99 = sphi 0, %s101
      %s102 = sphi 0, %s99
      %s103 = sphi 0, %s102
      %s119 = sphi 0, %s103
    $region4: #{tpu_custom_call.1} parent=1 // loop_header_branch
      %19 = sbr.rel (%p17) target = $region8
    $region5: #{tpu_custom_call.1} parent=1 // loop_body
      %s21 = ssub.s32 %s16, 1
      %s22 = ssub.s32 %s16, 2
      %s23 = sadd.s32 %s16, 1
      %s24 = ssub.s32 %s16, %s23
      %p25 = scmp.eq.s32.totalorder %s24, 0
      %s27 = sadd.s32 %s26, 1
      %s28 = scalar_select %p25, %s26, %s27
      %p31 = pneg %p25
      %p32 = scmp.eq.s32.totalorder %s16, 1
      %p33 = por %p31, %p32
      %p34 = scmp.ne.s32.totalorder %s26, %s29
      %p35 = scmp.eq.s32.totalorder %s16, 0
      %p36 = por %p34, %p35
      %p37 = scmp.ne.s32.totalorder %s26, %s29
      %p38 = scmp.eq.s32.totalorder %s21, 1
      %p39 = por %p37, %p38
      %p40 = scmp.ne.s32.totalorder %s29, %s30
      %p41 = scmp.eq.s32.totalorder %s21, 0
      %p42 = por %p40, %p41
      %p43 = scmp.ne.s32.totalorder %s29, %s30
      %p44 = scmp.eq.s32.totalorder %s22, 1
      %p45 = por %p43, %p44
      %p47 = scmp.ne.s32.totalorder %s30, %s46
      %p48 = scmp.eq.s32.totalorder %s22, 0
      %p49 = por %p47, %p48
      %s51 = sadd.s32 %s50, 1
      %p54 = scmp.eq.s32.totalorder %s16, 1
      %p55 = scmp.ne.s32.totalorder %s50, %s52
      %p56 = scmp.eq.s32.totalorder %s16, 0
      %p57 = por %p55, %p56
      %p58 = scmp.ne.s32.totalorder %s50, %s52
      %p59 = scmp.eq.s32.totalorder %s21, 1
      %p60 = por %p58, %p59
      %p61 = scmp.ne.s32.totalorder %s52, %s53
      %p62 = scmp.eq.s32.totalorder %s21, 0
      %p63 = por %p61, %p62
      %p64 = scmp.ne.s32.totalorder %s52, %s53
      %p65 = scmp.eq.s32.totalorder %s22, 1
      %p66 = por %p64, %p65
      %p68 = scmp.ne.s32.totalorder %s53, %s67
      %p69 = scmp.eq.s32.totalorder %s22, 0
      %p70 = por %p68, %p69
      %s71 = ssub.s32 %s16, %s23
      %p72 = scmp.eq.s32.totalorder %s71, 0
      %s74 = sadd.s32 %s73, 1
      %s75 = scalar_select %p72, %s73, %s74
      %p78 = pneg %p72
      %p79 = scmp.eq.s32.totalorder %s16, 1
      %p80 = por %p78, %p79
      %p81 = scmp.ne.s32.totalorder %s73, %s76
      %p82 = scmp.eq.s32.totalorder %s16, 0
      %p83 = por %p81, %p82
      %p84 = scmp.ne.s32.totalorder %s73, %s76
      %p85 = scmp.eq.s32.totalorder %s21, 1
      %p86 = por %p84, %p85
      %p87 = scmp.ne.s32.totalorder %s76, %s77
      %p88 = scmp.eq.s32.totalorder %s21, 0
      %p89 = por %p87, %p88
      %p90 = scmp.ne.s32.totalorder %s76, %s77
      %p91 = scmp.eq.s32.totalorder %s22, 1
      %p92 = por %p90, %p91
      %p94 = scmp.ne.s32.totalorder %s77, %s93
      %p95 = scmp.eq.s32.totalorder %s22, 0
      %p96 = por %p94, %p95
      %s97 = ssub.s32 %s16, %s23
      %p98 = scmp.eq.s32.totalorder %s97, 0
      %s100 = sadd.s32 %s99, 1
      %s101 = scalar_select %p98, %s99, %s100
      %p104 = pneg %p98
      %p105 = scmp.eq.s32.totalorder %s16, 1
      %p106 = por %p104, %p105
      %p107 = scmp.ne.s32.totalorder %s99, %s102
      %p108 = scmp.eq.s32.totalorder %s16, 0
      %p109 = por %p107, %p108
      %p110 = scmp.ne.s32.totalorder %s99, %s102
      %p111 = scmp.eq.s32.totalorder %s21, 1
      %p112 = por %p110, %p111
      %p113 = scmp.ne.s32.totalorder %s102, %s103
      %p114 = scmp.eq.s32.totalorder %s21, 0
      %p115 = por %p113, %p114
      %p116 = scmp.ne.s32.totalorder %s102, %s103
      %p117 = scmp.eq.s32.totalorder %s22, 1
      %p118 = por %p116, %p117
      %p120 = scmp.ne.s32.totalorder %s103, %s119
      %p121 = scmp.eq.s32.totalorder %s22, 0
      %p122 = por %p120, %p121
      %p123 = scmp.le.s32.totalorder 1, %s16
      %p124 = scmp.lt.s32.totalorder %s16, 3
      %p125 = pnand %p123, %p124
      %p126 = pneg %p125
      // Predicated region
      $region9: #{tpu_custom_call.1} parent=5 // pred_check
        _
      $region10: #{tpu_custom_call.1} parent=5 // pred_check_branch
        %128 = sbr.rel (%p125) target = $region12
      $region11: #{tpu_custom_call.1} parent=5 // pred_region
        %s129 = ssub.s32 %s16, 1
        // Predicated region
        $region13: #{tpu_custom_call.1} parent=11 // pred_check
          %p130 = pneg %p63
        $region14: #{tpu_custom_call.1} parent=11 // pred_check_branch
          %132 = sbr.rel (%p130) target = $region16
        $region15: #{tpu_custom_call.1} parent=11 // pred_region
          _
        $region16: #{tpu_custom_call.1} parent=11 // pred_fallthru
          _
      $region12: #{tpu_custom_call.1} parent=5 // pred_fallthru
        _
      %p133 = scmp.lt.s32.totalorder %s16, 2
      // Predicated region
      $region17: #{tpu_custom_call.1} parent=5 // pred_check
        %p134 = pneg %p133
      $region18: #{tpu_custom_call.1} parent=5 // pred_check_branch
        %136 = sbr.rel (%p134) target = $region20
      $region19: #{tpu_custom_call.1} parent=5 // pred_region
        // Predicated region
        $region21: #{tpu_custom_call.1} parent=19 // pred_check
          %p137 = pneg %p36
        $region22: #{tpu_custom_call.1} parent=19 // pred_check_branch
          %139 = sbr.rel (%p137) target = $region24
        $region23: #{tpu_custom_call.1} parent=19 // pred_region
          %p140 = scmp.lt.s32.totalorder %s16, 1
          %s141 = scalar_select %p140, %s16, 1
          %s142 = smul.addr %s141, 54
          %s143 = smul.addr %s142, 8
          %s144 = scalar_lea.vmem %s0, %s143
        $region24: #{tpu_custom_call.1} parent=19 // pred_fallthru
          _
      $region20: #{tpu_custom_call.1} parent=5 // pred_fallthru
        _
      %p145 = scmp.le.s32.totalorder 1, %s16
      %p146 = scmp.lt.s32.totalorder %s16, 3
      %p147 = pnand %p145, %p146
      %p148 = pneg %p147
      // Predicated region
      $region25: #{tpu_custom_call.1} parent=5 // pred_check
        _
      $region26: #{tpu_custom_call.1} parent=5 // pred_check_branch
        %150 = sbr.rel (%p147) target = $region28
      $region27: #{tpu_custom_call.1} parent=5 // pred_region
        %s151 = ssub.s32 %s16, 1
        %p152 = scmp.lt.s32.totalorder %s21, 1
        %s153 = scalar_select %p152, %s21, 1
        %s154 = smul.addr %s153, 54
        %s155 = smul.addr %s154, 8
        %s156 = scalar_lea.vmem %s0, %s155
        %p157 = pneg %p42
        %p158 = pneg %p39
        %p159 = pneg %p63
        %p160 = pneg %p60
        %p161 = pneg %p89
        %p162 = pneg %p86
        %s163 = sand.u32 %s76, 1
        %s164 = scalar_lea.sflag [#allocation4], %s163
        %s165 = sand.u32 %s76, 1
        %s166 = smul.addr %s165, 8
        %s167 = scalar_lea.vmem [#allocation3], %s166
        %p168 = pneg %p115
        %p169 = pneg %p112
        %s170 = sand.u32 %s102, 1
        %s171 = scalar_lea.sflag [#allocation6], %s170
        %s172 = sand.u32 %s102, 1
        %s173 = smul.addr %s172, 8
        %s174 = scalar_lea.vmem [#allocation5], %s173
        %p175 = scmp.lt.s32.totalorder %s21, 1
        %s176 = scalar_select %p175, %s21, 1
        %s177 = smul.addr %s176, 54
        %s178 = smul.addr %s177, 8
        %s179 = scalar_lea.vmem %s0, %s178
        %v180 = vld [vmem:[%s179] sm:$0xff]
        %v181 = vld [vmem:[%s179 + $0x8] sm:$0xff]
        %v182 = vld [vmem:[%s179 + $0x10] sm:$0x3]
        %v183 = vld [vmem:[%s179 + $0x18] sm:$0xff]
        %v184 = vld [vmem:[%s179 + $0x20] sm:$0xff]
        %v185 = vld [vmem:[%s179 + $0x28] sm:$0x3]
        %v186 = vld [vmem:[%s179 + $0x30] sm:$0xff]
        %v187 = vld [vmem:[%s179 + $0x38] sm:$0xff]
        %v188 = vld [vmem:[%s179 + $0x40] sm:$0x3]
        %v189 = vld [vmem:[%s179 + $0x48] sm:$0xff]
        %v190 = vld [vmem:[%s179 + $0x50] sm:$0xff]
        %v191 = vld [vmem:[%s179 + $0x58] sm:$0x3]
        %v192 = vld [vmem:[%s179 + $0x60] sm:$0xff]
        %v193 = vld [vmem:[%s179 + $0x68] sm:$0xff]
        %v194 = vld [vmem:[%s179 + $0x70] sm:$0x3]
        %v195 = vld [vmem:[%s179 + $0x78] sm:$0xff]
        %v196 = vld [vmem:[%s179 + $0x80] sm:$0xff]
        %v197 = vld [vmem:[%s179 + $0x88] sm:$0x3]
        %v198 = vld [vmem:[%s179 + $0x90] sm:$0xff]
        %v199 = vld [vmem:[%s179 + $0x98] sm:$0xff]
        %v200 = vld [vmem:[%s179 + $0xa0] sm:$0x3]
        %v201 = vld [vmem:[%s179 + $0xa8] sm:$0xff]
        %v202 = vld [vmem:[%s179 + $0xb0] sm:$0xff]
        %v203 = vld [vmem:[%s179 + $0xb8] sm:$0x3]
        %v204 = vld [vmem:[%s179 + $0xc0] sm:$0xff]
        %v205 = vld [vmem:[%s179 + $0xc8] sm:$0xff]
        %v206 = vld [vmem:[%s179 + $0xd0] sm:$0x3]
        %v207 = vld [vmem:[%s179 + $0xd8] sm:$0xff]
        %v208 = vld [vmem:[%s179 + $0xe0] sm:$0xff]
        %v209 = vld [vmem:[%s179 + $0xe8] sm:$0x3]
        %v210 = vld [vmem:[%s179 + $0xf0] sm:$0xff]
        %v211 = vld [vmem:[%s179 + $0xf8] sm:$0xff]
        %v212 = vld [vmem:[%s179 + $0x100] sm:$0x3]
        %v213 = vld [vmem:[%s179 + $0x108] sm:$0xff]
        %v214 = vld [vmem:[%s179 + $0x110] sm:$0xff]
        %v215 = vld [vmem:[%s179 + $0x118] sm:$0x3]
        %v216 = vld [vmem:[%s179 + $0x120] sm:$0xff]
        %v217 = vld [vmem:[%s179 + $0x128] sm:$0xff]
        %v218 = vld [vmem:[%s179 + $0x130] sm:$0x3]
        %v219 = vld [vmem:[%s179 + $0x138] sm:$0xff]
        %v220 = vld [vmem:[%s179 + $0x140] sm:$0xff]
        %v221 = vld [vmem:[%s179 + $0x148] sm:$0x3]
        %v222 = vld [vmem:[%s179 + $0x150] sm:$0xff]
        %v223 = vld [vmem:[%s179 + $0x158] sm:$0xff]
        %v224 = vld [vmem:[%s179 + $0x160] sm:$0x3]
        %v225 = vld [vmem:[%s179 + $0x168] sm:$0xff]
        %v226 = vld [vmem:[%s179 + $0x170] sm:$0xff]
        %v227 = vld [vmem:[%s179 + $0x178] sm:$0x3]
        %v228 = vld [vmem:[%s179 + $0x180] sm:$0xff]
        %v229 = vld [vmem:[%s179 + $0x188] sm:$0xff]
        %v230 = vld [vmem:[%s179 + $0x190] sm:$0x3]
        %v231 = vld [vmem:[%s179 + $0x198] sm:$0xff]
        %v232 = vld [vmem:[%s179 + $0x1a0] sm:$0xff]
        %v233 = vld [vmem:[%s179 + $0x1a8] sm:$0x3]
        %v234 = vmax.f32 %v180, 0.0
        %v235 = vmax.f32 %v181, 0.0
        %v236 = vmax.f32 %v182, 0.0
        %v237 = vmax.f32 %v183, 0.0
        %v238 = vmax.f32 %v184, 0.0
        %v239 = vmax.f32 %v185, 0.0
        %v240 = vmax.f32 %v186, 0.0
        %v241 = vmax.f32 %v187, 0.0
        %v242 = vmax.f32 %v188, 0.0
        %v243 = vmax.f32 %v189, 0.0
        %v244 = vmax.f32 %v190, 0.0
        %v245 = vmax.f32 %v191, 0.0
        %v246 = vmax.f32 %v192, 0.0
        %v247 = vmax.f32 %v193, 0.0
        %v248 = vmax.f32 %v194, 0.0
        %v249 = vmax.f32 %v195, 0.0
        %v250 = vmax.f32 %v196, 0.0
        %v251 = vmax.f32 %v197, 0.0
        %v252 = vmax.f32 %v198, 0.0
        %v253 = vmax.f32 %v199, 0.0
        %v254 = vmax.f32 %v200, 0.0
        %v255 = vmax.f32 %v201, 0.0
        %v256 = vmax.f32 %v202, 0.0
        %v257 = vmax.f32 %v203, 0.0
        %v258 = vmax.f32 %v204, 0.0
        %v259 = vmax.f32 %v205, 0.0
        %v260 = vmax.f32 %v206, 0.0
        %v261 = vmax.f32 %v207, 0.0
        %v262 = vmax.f32 %v208, 0.0
        %v263 = vmax.f32 %v209, 0.0
        %v264 = vmax.f32 %v210, 0.0
        %v265 = vmax.f32 %v211, 0.0
        %v266 = vmax.f32 %v212, 0.0
        %v267 = vmax.f32 %v213, 0.0
        %v268 = vmax.f32 %v214, 0.0
        %v269 = vmax.f32 %v215, 0.0
        %v270 = vmax.f32 %v216, 0.0
        %v271 = vmax.f32 %v217, 0.0
        %v272 = vmax.f32 %v218, 0.0
        %v273 = vmax.f32 %v219, 0.0
        %v274 = vmax.f32 %v220, 0.0
        %v275 = vmax.f32 %v221, 0.0
        %v276 = vmax.f32 %v222, 0.0
        %v277 = vmax.f32 %v223, 0.0
        %v278 = vmax.f32 %v224, 0.0
        %v279 = vmax.f32 %v225, 0.0
        %v280 = vmax.f32 %v226, 0.0
        %v281 = vmax.f32 %v227, 0.0
        %v282 = vmax.f32 %v228, 0.0
        %v283 = vmax.f32 %v229, 0.0
        %v284 = vmax.f32 %v230, 0.0
        %v285 = vmax.f32 %v231, 0.0
        %v286 = vmax.f32 %v232, 0.0
        %v287 = vmax.f32 %v233, 0.0
        %vm288 = vcmask 31744
        %289 = vst.msk [vmem:[#allocation2] sm:$0xff] %vm288, %v234
        %290 = vst.msk [vmem:[#allocation2 + $0x8] sm:$0xff] %vm288, %v235
        %291 = vst.msk [vmem:[#allocation2 + $0x10] sm:$0xff] %vm288, %v237
        %292 = vst.msk [vmem:[#allocation2 + $0x18] sm:$0xff] %vm288, %v238
        %293 = vst.msk [vmem:[#allocation2 + $0x20] sm:$0xff] %vm288, %v240
        %294 = vst.msk [vmem:[#allocation2 + $0x28] sm:$0xff] %vm288, %v241
        %295 = vst.msk [vmem:[#allocation2 + $0x30] sm:$0xff] %vm288, %v243
        %296 = vst.msk [vmem:[#allocation2 + $0x38] sm:$0xff] %vm288, %v244
        %297 = vst.msk [vmem:[#allocation2 + $0x40] sm:$0xff] %vm288, %v246
        %298 = vst.msk [vmem:[#allocation2 + $0x48] sm:$0xff] %vm288, %v247
        %299 = vst.msk [vmem:[#allocation2 + $0x50] sm:$0xff] %vm288, %v249
        %300 = vst.msk [vmem:[#allocation2 + $0x58] sm:$0xff] %vm288, %v250
        %301 = vst.msk [vmem:[#allocation2 + $0x60] sm:$0xff] %vm288, %v252
        %302 = vst.msk [vmem:[#allocation2 + $0x68] sm:$0xff] %vm288, %v253
        %303 = vst.msk [vmem:[#allocation2 + $0x70] sm:$0xff] %vm288, %v255
        %304 = vst.msk [vmem:[#allocation2 + $0x78] sm:$0xff] %vm288, %v256
        %305 = vst.msk [vmem:[#allocation2 + $0x80] sm:$0xff] %vm288, %v258
        %306 = vst.msk [vmem:[#allocation2 + $0x88] sm:$0xff] %vm288, %v259
        %307 = vst.msk [vmem:[#allocation2 + $0x90] sm:$0xff] %vm288, %v261
        %308 = vst.msk [vmem:[#allocation2 + $0x98] sm:$0xff] %vm288, %v262
        %309 = vst.msk [vmem:[#allocation2 + $0xa0] sm:$0xff] %vm288, %v264
        %310 = vst.msk [vmem:[#allocation2 + $0xa8] sm:$0xff] %vm288, %v265
        %311 = vst.msk [vmem:[#allocation2 + $0xb0] sm:$0xff] %vm288, %v267
        %312 = vst.msk [vmem:[#allocation2 + $0xb8] sm:$0xff] %vm288, %v268
        %313 = vst.msk [vmem:[#allocation2 + $0xc0] sm:$0xff] %vm288, %v270
        %314 = vst.msk [vmem:[#allocation2 + $0xc8] sm:$0xff] %vm288, %v271
        %315 = vst.msk [vmem:[#allocation2 + $0xd0] sm:$0xff] %vm288, %v273
        %316 = vst.msk [vmem:[#allocation2 + $0xd8] sm:$0xff] %vm288, %v274
        %317 = vst.msk [vmem:[#allocation2 + $0xe0] sm:$0xff] %vm288, %v276
        %318 = vst.msk [vmem:[#allocation2 + $0xe8] sm:$0xff] %vm288, %v277
        %319 = vst.msk [vmem:[#allocation2 + $0xf0] sm:$0xff] %vm288, %v279
        %320 = vst.msk [vmem:[#allocation2 + $0xf8] sm:$0xff] %vm288, %v280
        %369 = vrot.lane.b32.xlu0 %v234, 4
        %v370 = vpop.permute.xlu0 %369
        %371 = vrot.lane.b32.xlu0 %v235, 4
        %v372 = vpop.permute.xlu0 %371
        %373 = vrot.lane.b32.xlu0 %v236, 4
        %v374 = vpop.permute.xlu0 %373
        %375 = vrot.lane.b32.xlu0 %v237, 4
        %v376 = vpop.permute.xlu0 %375
        %377 = vrot.lane.b32.xlu0 %v238, 4
        %v378 = vpop.permute.xlu0 %377
        %379 = vrot.lane.b32.xlu0 %v239, 4
        %v380 = vpop.permute.xlu0 %379
        %381 = vrot.lane.b32.xlu0 %v240, 4
        %v382 = vpop.permute.xlu0 %381
        %383 = vrot.lane.b32.xlu0 %v241, 4
        %v384 = vpop.permute.xlu0 %383
        %385 = vrot.lane.b32.xlu0 %v242, 4
        %v386 = vpop.permute.xlu0 %385
        %387 = vrot.lane.b32.xlu0 %v243, 4
        %v388 = vpop.permute.xlu0 %387
        %389 = vrot.lane.b32.xlu0 %v244, 4
        %v390 = vpop.permute.xlu0 %389
        %391 = vrot.lane.b32.xlu0 %v245, 4
        %v392 = vpop.permute.xlu0 %391
        %393 = vrot.lane.b32.xlu0 %v246, 4
        %v394 = vpop.permute.xlu0 %393
        %395 = vrot.lane.b32.xlu0 %v247, 4
        %v396 = vpop.permute.xlu0 %395
        %397 = vrot.lane.b32.xlu0 %v248, 4
        %v398 = vpop.permute.xlu0 %397
        %399 = vrot.lane.b32.xlu0 %v249, 4
        %v400 = vpop.permute.xlu0 %399
        %401 = vrot.lane.b32.xlu0 %v250, 4
        %v402 = vpop.permute.xlu0 %401
        %403 = vrot.lane.b32.xlu0 %v251, 4
        %v404 = vpop.permute.xlu0 %403
        %405 = vrot.lane.b32.xlu0 %v252, 4
        %v406 = vpop.permute.xlu0 %405
        %407 = vrot.lane.b32.xlu0 %v253, 4
        %v408 = vpop.permute.xlu0 %407
        %409 = vrot.lane.b32.xlu0 %v254, 4
        %v410 = vpop.permute.xlu0 %409
        %411 = vrot.lane.b32.xlu0 %v255, 4
        %v412 = vpop.permute.xlu0 %411
        %413 = vrot.lane.b32.xlu0 %v256, 4
        %v414 = vpop.permute.xlu0 %413
        %415 = vrot.lane.b32.xlu0 %v257, 4
        %v416 = vpop.permute.xlu0 %415
        %417 = vrot.lane.b32.xlu0 %v258, 4
        %v418 = vpop.permute.xlu0 %417
        %419 = vrot.lane.b32.xlu0 %v259, 4
        %v420 = vpop.permute.xlu0 %419
        %421 = vrot.lane.b32.xlu0 %v260, 4
        %v422 = vpop.permute.xlu0 %421
        %423 = vrot.lane.b32.xlu0 %v261, 4
        %v424 = vpop.permute.xlu0 %423
        %425 = vrot.lane.b32.xlu0 %v262, 4
        %v426 = vpop.permute.xlu0 %425
        %427 = vrot.lane.b32.xlu0 %v263, 4
        %v428 = vpop.permute.xlu0 %427
        %429 = vrot.lane.b32.xlu0 %v264, 4
        %v430 = vpop.permute.xlu0 %429
        %431 = vrot.lane.b32.xlu0 %v265, 4
        %v432 = vpop.permute.xlu0 %431
        %433 = vrot.lane.b32.xlu0 %v266, 4
        %v434 = vpop.permute.xlu0 %433
        %435 = vrot.lane.b32.xlu0 %v267, 4
        %v436 = vpop.permute.xlu0 %435
        %437 = vrot.lane.b32.xlu0 %v268, 4
        %v438 = vpop.permute.xlu0 %437
        %439 = vrot.lane.b32.xlu0 %v269, 4
        %v440 = vpop.permute.xlu0 %439
        %441 = vrot.lane.b32.xlu0 %v270, 4
        %v442 = vpop.permute.xlu0 %441
        %443 = vrot.lane.b32.xlu0 %v271, 4
        %v444 = vpop.permute.xlu0 %443
        %445 = vrot.lane.b32.xlu0 %v272, 4
        %v446 = vpop.permute.xlu0 %445
        %447 = vrot.lane.b32.xlu0 %v273, 4
        %v448 = vpop.permute.xlu0 %447
        %449 = vrot.lane.b32.xlu0 %v274, 4
        %v450 = vpop.permute.xlu0 %449
        %451 = vrot.lane.b32.xlu0 %v275, 4
        %v452 = vpop.permute.xlu0 %451
        %453 = vrot.lane.b32.xlu0 %v276, 4
        %v454 = vpop.permute.xlu0 %453
        %455 = vrot.lane.b32.xlu0 %v277, 4
        %v456 = vpop.permute.xlu0 %455
        %457 = vrot.lane.b32.xlu0 %v278, 4
        %v458 = vpop.permute.xlu0 %457
        %459 = vrot.lane.b32.xlu0 %v279, 4
        %v460 = vpop.permute.xlu0 %459
        %461 = vrot.lane.b32.xlu0 %v280, 4
        %v462 = vpop.permute.xlu0 %461
        %463 = vrot.lane.b32.xlu0 %v281, 4
        %v464 = vpop.permute.xlu0 %463
        %vm513 = vcmask 64545
        %514 = vst.msk [vmem:[#allocation2 - $0x1] sm:$0xfe] %vm513, %v370
        %vm515 = vcmask 64544
        %516 = vst.msk [vmem:[#allocation2 + $0x7] sm:$0xff] %vm515, %v372
        %vm517 = vcmask 57376
        %518 = vst.msk [vmem:[#allocation2 + $0xf] sm:$0x1] %vm517, %v374
        %519 = vst.msk [vmem:[#allocation2 + $0xf] sm:$0xfe] %vm513, %v376
        %520 = vst.msk [vmem:[#allocation2 + $0x17] sm:$0xff] %vm515, %v378
        %521 = vst.msk [vmem:[#allocation2 + $0x1f] sm:$0x1] %vm517, %v380
        %522 = vst.msk [vmem:[#allocation2 + $0x1f] sm:$0xfe] %vm513, %v382
        %523 = vst.msk [vmem:[#allocation2 + $0x27] sm:$0xff] %vm515, %v384
        %524 = vst.msk [vmem:[#allocation2 + $0x2f] sm:$0x1] %vm517, %v386
        %525 = vst.msk [vmem:[#allocation2 + $0x2f] sm:$0xfe] %vm513, %v388
        %526 = vst.msk [vmem:[#allocation2 + $0x37] sm:$0xff] %vm515, %v390
        %527 = vst.msk [vmem:[#allocation2 + $0x3f] sm:$0x1] %vm517, %v392
        %528 = vst.msk [vmem:[#allocation2 + $0x3f] sm:$0xfe] %vm513, %v394
        %529 = vst.msk [vmem:[#allocation2 + $0x47] sm:$0xff] %vm515, %v396
        %530 = vst.msk [vmem:[#allocation2 + $0x4f] sm:$0x1] %vm517, %v398
        %531 = vst.msk [vmem:[#allocation2 + $0x4f] sm:$0xfe] %vm513, %v400
        %532 = vst.msk [vmem:[#allocation2 + $0x57] sm:$0xff] %vm515, %v402
        %533 = vst.msk [vmem:[#allocation2 + $0x5f] sm:$0x1] %vm517, %v404
        %534 = vst.msk [vmem:[#allocation2 + $0x5f] sm:$0xfe] %vm513, %v406
        %535 = vst.msk [vmem:[#allocation2 + $0x67] sm:$0xff] %vm515, %v408
        %536 = vst.msk [vmem:[#allocation2 + $0x6f] sm:$0x1] %vm517, %v410
        %537 = vst.msk [vmem:[#allocation2 + $0x6f] sm:$0xfe] %vm513, %v412
        %538 = vst.msk [vmem:[#allocation2 + $0x77] sm:$0xff] %vm515, %v414
        %539 = vst.msk [vmem:[#allocation2 + $0x7f] sm:$0x1] %vm517, %v416
        %540 = vst.msk [vmem:[#allocation2 + $0x7f] sm:$0xfe] %vm513, %v418
        %541 = vst.msk [vmem:[#allocation2 + $0x87] sm:$0xff] %vm515, %v420
        %542 = vst.msk [vmem:[#allocation2 + $0x8f] sm:$0x1] %vm517, %v422
        %543 = vst.msk [vmem:[#allocation2 + $0x8f] sm:$0xfe] %vm513, %v424
        %544 = vst.msk [vmem:[#allocation2 + $0x97] sm:$0xff] %vm515, %v426
        %545 = vst.msk [vmem:[#allocation2 + $0x9f] sm:$0x1] %vm517, %v428
        %546 = vst.msk [vmem:[#allocation2 + $0x9f] sm:$0xfe] %vm513, %v430
        %547 = vst.msk [vmem:[#allocation2 + $0xa7] sm:$0xff] %vm515, %v432
        %548 = vst.msk [vmem:[#allocation2 + $0xaf] sm:$0x1] %vm517, %v434
        %549 = vst.msk [vmem:[#allocation2 + $0xaf] sm:$0xfe] %vm513, %v436
        %550 = vst.msk [vmem:[#allocation2 + $0xb7] sm:$0xff] %vm515, %v438
        %551 = vst.msk [vmem:[#allocation2 + $0xbf] sm:$0x1] %vm517, %v440
        %552 = vst.msk [vmem:[#allocation2 + $0xbf] sm:$0xfe] %vm513, %v442
        %553 = vst.msk [vmem:[#allocation2 + $0xc7] sm:$0xff] %vm515, %v444
        %554 = vst.msk [vmem:[#allocation2 + $0xcf] sm:$0x1] %vm517, %v446
        %555 = vst.msk [vmem:[#allocation2 + $0xcf] sm:$0xfe] %vm513, %v448
        %556 = vst.msk [vmem:[#allocation2 + $0xd7] sm:$0xff] %vm515, %v450
        %557 = vst.msk [vmem:[#allocation2 + $0xdf] sm:$0x1] %vm517, %v452
        %558 = vst.msk [vmem:[#allocation2 + $0xdf] sm:$0xfe] %vm513, %v454
        %559 = vst.msk [vmem:[#allocation2 + $0xe7] sm:$0xff] %vm515, %v456
        %560 = vst.msk [vmem:[#allocation2 + $0xef] sm:$0x1] %vm517, %v458
        %561 = vst.msk [vmem:[#allocation2 + $0xef] sm:$0xfe] %vm513, %v460
        %562 = vst.msk [vmem:[#allocation2 + $0xf7] sm:$0xff] %vm515, %v462
        %563 = vst.msk [vmem:[#allocation2 + $0xff] sm:$0x1] %vm517, %v464
        %564 = vrot.lane.b32.xlu0 %v234, 8
        %v565 = vpop.permute.xlu0 %564
        %566 = vrot.lane.b32.xlu0 %v235, 8
        %v567 = vpop.permute.xlu0 %566
        %568 = vrot.lane.b32.xlu0 %v236, 8
        %v569 = vpop.permute.xlu0 %568
        %570 = vrot.lane.b32.xlu0 %v237, 8
        %v571 = vpop.permute.xlu0 %570
        %572 = vrot.lane.b32.xlu0 %v238, 8
        %v573 = vpop.permute.xlu0 %572
        %574 = vrot.lane.b32.xlu0 %v239, 8
        %v575 = vpop.permute.xlu0 %574
        %576 = vrot.lane.b32.xlu0 %v240, 8
        %v577 = vpop.permute.xlu0 %576
        %578 = vrot.lane.b32.xlu0 %v241, 8
        %v579 = vpop.permute.xlu0 %578
        %580 = vrot.lane.b32.xlu0 %v242, 8
        %v581 = vpop.permute.xlu0 %580
        %582 = vrot.lane.b32.xlu0 %v243, 8
        %v583 = vpop.permute.xlu0 %582
        %584 = vrot.lane.b32.xlu0 %v244, 8
        %v585 = vpop.permute.xlu0 %584
        %586 = vrot.lane.b32.xlu0 %v245, 8
        %v587 = vpop.permute.xlu0 %586
        %588 = vrot.lane.b32.xlu0 %v246, 8
        %v589 = vpop.permute.xlu0 %588
        %590 = vrot.lane.b32.xlu0 %v247, 8
        %v591 = vpop.permute.xlu0 %590
        %592 = vrot.lane.b32.xlu0 %v248, 8
        %v593 = vpop.permute.xlu0 %592
        %594 = vrot.lane.b32.xlu0 %v249, 8
        %v595 = vpop.permute.xlu0 %594
        %596 = vrot.lane.b32.xlu0 %v250, 8
        %v597 = vpop.permute.xlu0 %596
        %598 = vrot.lane.b32.xlu0 %v251, 8
        %v599 = vpop.permute.xlu0 %598
        %600 = vrot.lane.b32.xlu0 %v252, 8
        %v601 = vpop.permute.xlu0 %600
        %602 = vrot.lane.b32.xlu0 %v253, 8
        %v603 = vpop.permute.xlu0 %602
        %604 = vrot.lane.b32.xlu0 %v254, 8
        %v605 = vpop.permute.xlu0 %604
        %606 = vrot.lane.b32.xlu0 %v255, 8
        %v607 = vpop.permute.xlu0 %606
        %608 = vrot.lane.b32.xlu0 %v256, 8
        %v609 = vpop.permute.xlu0 %608
        %610 = vrot.lane.b32.xlu0 %v257, 8
        %v611 = vpop.permute.xlu0 %610
        %612 = vrot.lane.b32.xlu0 %v258, 8
        %v613 = vpop.permute.xlu0 %612
        %614 = vrot.lane.b32.xlu0 %v259, 8
        %v615 = vpop.permute.xlu0 %614
        %616 = vrot.lane.b32.xlu0 %v260, 8
        %v617 = vpop.permute.xlu0 %616
        %618 = vrot.lane.b32.xlu0 %v261, 8
        %v619 = vpop.permute.xlu0 %618
        %620 = vrot.lane.b32.xlu0 %v262, 8
        %v621 = vpop.permute.xlu0 %620
        %622 = vrot.lane.b32.xlu0 %v263, 8
        %v623 = vpop.permute.xlu0 %622
        %624 = vrot.lane.b32.xlu0 %v264, 8
        %v625 = vpop.permute.xlu0 %624
        %626 = vrot.lane.b32.xlu0 %v265, 8
        %v627 = vpop.permute.xlu0 %626
        %628 = vrot.lane.b32.xlu0 %v266, 8
        %v629 = vpop.permute.xlu0 %628
        %630 = vrot.lane.b32.xlu0 %v267, 8
        %v631 = vpop.permute.xlu0 %630
        %632 = vrot.lane.b32.xlu0 %v268, 8
        %v633 = vpop.permute.xlu0 %632
        %634 = vrot.lane.b32.xlu0 %v269, 8
        %v635 = vpop.permute.xlu0 %634
        %636 = vrot.lane.b32.xlu0 %v270, 8
        %v637 = vpop.permute.xlu0 %636
        %638 = vrot.lane.b32.xlu0 %v271, 8
        %v639 = vpop.permute.xlu0 %638
        %640 = vrot.lane.b32.xlu0 %v272, 8
        %v641 = vpop.permute.xlu0 %640
        %642 = vrot.lane.b32.xlu0 %v273, 8
        %v643 = vpop.permute.xlu0 %642
        %644 = vrot.lane.b32.xlu0 %v274, 8
        %v645 = vpop.permute.xlu0 %644
        %646 = vrot.lane.b32.xlu0 %v275, 8
        %v647 = vpop.permute.xlu0 %646
        %648 = vrot.lane.b32.xlu0 %v276, 8
        %v649 = vpop.permute.xlu0 %648
        %650 = vrot.lane.b32.xlu0 %v277, 8
        %v651 = vpop.permute.xlu0 %650
        %652 = vrot.lane.b32.xlu0 %v278, 8
        %v653 = vpop.permute.xlu0 %652
        %654 = vrot.lane.b32.xlu0 %v279, 8
        %v655 = vpop.permute.xlu0 %654
        %656 = vrot.lane.b32.xlu0 %v280, 8
        %v657 = vpop.permute.xlu0 %656
        %658 = vrot.lane.b32.xlu0 %v281, 8
        %v659 = vpop.permute.xlu0 %658
        %vm708 = vcmask 97346
        %709 = vst.msk [vmem:[#allocation2 - $0x2] sm:$0xfc] %vm708, %v565
        %vm710 = vcmask 97344
        %711 = vst.msk [vmem:[#allocation2 + $0x6] sm:$0xff] %vm710, %v567
        %vm712 = vcmask 91200
        %713 = vst.msk [vmem:[#allocation2 + $0xe] sm:$0x3] %vm712, %v569
        %714 = vst.msk [vmem:[#allocation2 + $0xe] sm:$0xfc] %vm708, %v571
        %715 = vst.msk [vmem:[#allocation2 + $0x16] sm:$0xff] %vm710, %v573
        %716 = vst.msk [vmem:[#allocation2 + $0x1e] sm:$0x3] %vm712, %v575
        %717 = vst.msk [vmem:[#allocation2 + $0x1e] sm:$0xfc] %vm708, %v577
        %718 = vst.msk [vmem:[#allocation2 + $0x26] sm:$0xff] %vm710, %v579
        %719 = vst.msk [vmem:[#allocation2 + $0x2e] sm:$0x3] %vm712, %v581
        %720 = vst.msk [vmem:[#allocation2 + $0x2e] sm:$0xfc] %vm708, %v583
        %721 = vst.msk [vmem:[#allocation2 + $0x36] sm:$0xff] %vm710, %v585
        %722 = vst.msk [vmem:[#allocation2 + $0x3e] sm:$0x3] %vm712, %v587
        %723 = vst.msk [vmem:[#allocation2 + $0x3e] sm:$0xfc] %vm708, %v589
        %724 = vst.msk [vmem:[#allocation2 + $0x46] sm:$0xff] %vm710, %v591
        %725 = vst.msk [vmem:[#allocation2 + $0x4e] sm:$0x3] %vm712, %v593
        %726 = vst.msk [vmem:[#allocation2 + $0x4e] sm:$0xfc] %vm708, %v595
        %727 = vst.msk [vmem:[#allocation2 + $0x56] sm:$0xff] %vm710, %v597
        %728 = vst.msk [vmem:[#allocation2 + $0x5e] sm:$0x3] %vm712, %v599
        %729 = vst.msk [vmem:[#allocation2 + $0x5e] sm:$0xfc] %vm708, %v601
        %730 = vst.msk [vmem:[#allocation2 + $0x66] sm:$0xff] %vm710, %v603
        %731 = vst.msk [vmem:[#allocation2 + $0x6e] sm:$0x3] %vm712, %v605
        %732 = vst.msk [vmem:[#allocation2 + $0x6e] sm:$0xfc] %vm708, %v607
        %733 = vst.msk [vmem:[#allocation2 + $0x76] sm:$0xff] %vm710, %v609
        %734 = vst.msk [vmem:[#allocation2 + $0x7e] sm:$0x3] %vm712, %v611
        %735 = vst.msk [vmem:[#allocation2 + $0x7e] sm:$0xfc] %vm708, %v613
        %736 = vst.msk [vmem:[#allocation2 + $0x86] sm:$0xff] %vm710, %v615
        %737 = vst.msk [vmem:[#allocation2 + $0x8e] sm:$0x3] %vm712, %v617
        %738 = vst.msk [vmem:[#allocation2 + $0x8e] sm:$0xfc] %vm708, %v619
        %739 = vst.msk [vmem:[#allocation2 + $0x96] sm:$0xff] %vm710, %v621
        %740 = vst.msk [vmem:[#allocation2 + $0x9e] sm:$0x3] %vm712, %v623
        %741 = vst.msk [vmem:[#allocation2 + $0x9e] sm:$0xfc] %vm708, %v625
        %742 = vst.msk [vmem:[#allocation2 + $0xa6] sm:$0xff] %vm710, %v627
        %743 = vst.msk [vmem:[#allocation2 + $0xae] sm:$0x3] %vm712, %v629
        %744 = vst.msk [vmem:[#allocation2 + $0xae] sm:$0xfc] %vm708, %v631
        %745 = vst.msk [vmem:[#allocation2 + $0xb6] sm:$0xff] %vm710, %v633
        %746 = vst.msk [vmem:[#allocation2 + $0xbe] sm:$0x3] %vm712, %v635
        %747 = vst.msk [vmem:[#allocation2 + $0xbe] sm:$0xfc] %vm708, %v637
        %748 = vst.msk [vmem:[#allocation2 + $0xc6] sm:$0xff] %vm710, %v639
        %749 = vst.msk [vmem:[#allocation2 + $0xce] sm:$0x3] %vm712, %v641
        %750 = vst.msk [vmem:[#allocation2 + $0xce] sm:$0xfc] %vm708, %v643
        %751 = vst.msk [vmem:[#allocation2 + $0xd6] sm:$0xff] %vm710, %v645
        %752 = vst.msk [vmem:[#allocation2 + $0xde] sm:$0x3] %vm712, %v647
        %753 = vst.msk [vmem:[#allocation2 + $0xde] sm:$0xfc] %vm708, %v649
        %754 = vst.msk [vmem:[#allocation2 + $0xe6] sm:$0xff] %vm710, %v651
        %755 = vst.msk [vmem:[#allocation2 + $0xee] sm:$0x3] %vm712, %v653
        %756 = vst.msk [vmem:[#allocation2 + $0xee] sm:$0xfc] %vm708, %v655
        %757 = vst.msk [vmem:[#allocation2 + $0xf6] sm:$0xff] %vm710, %v657
        %758 = vst.msk [vmem:[#allocation2 + $0xfe] sm:$0x3] %vm712, %v659
        %761 = vrot.lane.b32.xlu0 %v237, 12
        %v762 = vpop.permute.xlu0 %761
        %763 = vrot.lane.b32.xlu0 %v238, 12
        %v764 = vpop.permute.xlu0 %763
        %765 = vrot.lane.b32.xlu0 %v240, 12
        %v766 = vpop.permute.xlu0 %765
        %767 = vrot.lane.b32.xlu0 %v241, 12
        %v768 = vpop.permute.xlu0 %767
        %769 = vrot.lane.b32.xlu0 %v243, 12
        %v770 = vpop.permute.xlu0 %769
        %771 = vrot.lane.b32.xlu0 %v244, 12
        %v772 = vpop.permute.xlu0 %771
        %773 = vrot.lane.b32.xlu0 %v246, 12
        %v774 = vpop.permute.xlu0 %773
        %775 = vrot.lane.b32.xlu0 %v247, 12
        %v776 = vpop.permute.xlu0 %775
        %777 = vrot.lane.b32.xlu0 %v249, 12
        %v778 = vpop.permute.xlu0 %777
        %779 = vrot.lane.b32.xlu0 %v250, 12
        %v780 = vpop.permute.xlu0 %779
        %781 = vrot.lane.b32.xlu0 %v252, 12
        %v782 = vpop.permute.xlu0 %781
        %783 = vrot.lane.b32.xlu0 %v253, 12
        %v784 = vpop.permute.xlu0 %783
        %785 = vrot.lane.b32.xlu0 %v255, 12
        %v786 = vpop.permute.xlu0 %785
        %787 = vrot.lane.b32.xlu0 %v256, 12
        %v788 = vpop.permute.xlu0 %787
        %789 = vrot.lane.b32.xlu0 %v258, 12
        %v790 = vpop.permute.xlu0 %789
        %791 = vrot.lane.b32.xlu0 %v259, 12
        %v792 = vpop.permute.xlu0 %791
        %793 = vrot.lane.b32.xlu0 %v261, 12
        %v794 = vpop.permute.xlu0 %793
        %795 = vrot.lane.b32.xlu0 %v262, 12
        %v796 = vpop.permute.xlu0 %795
        %797 = vrot.lane.b32.xlu0 %v264, 12
        %v798 = vpop.permute.xlu0 %797
        %799 = vrot.lane.b32.xlu0 %v265, 12
        %v800 = vpop.permute.xlu0 %799
        %801 = vrot.lane.b32.xlu0 %v267, 12
        %v802 = vpop.permute.xlu0 %801
        %803 = vrot.lane.b32.xlu0 %v268, 12
        %v804 = vpop.permute.xlu0 %803
        %805 = vrot.lane.b32.xlu0 %v270, 12
        %v806 = vpop.permute.xlu0 %805
        %807 = vrot.lane.b32.xlu0 %v271, 12
        %v808 = vpop.permute.xlu0 %807
        %809 = vrot.lane.b32.xlu0 %v273, 12
        %v810 = vpop.permute.xlu0 %809
        %811 = vrot.lane.b32.xlu0 %v274, 12
        %v812 = vpop.permute.xlu0 %811
        %813 = vrot.lane.b32.xlu0 %v276, 12
        %v814 = vpop.permute.xlu0 %813
        %815 = vrot.lane.b32.xlu0 %v277, 12
        %v816 = vpop.permute.xlu0 %815
        %817 = vrot.lane.b32.xlu0 %v279, 12
        %v818 = vpop.permute.xlu0 %817
        %819 = vrot.lane.b32.xlu0 %v280, 12
        %v820 = vpop.permute.xlu0 %819
        %821 = vrot.lane.b32.xlu0 %v282, 12
        %v822 = vpop.permute.xlu0 %821
        %823 = vrot.lane.b32.xlu0 %v283, 12
        %v824 = vpop.permute.xlu0 %823
        %vm857 = vcmask 130144
        %858 = vst.msk [vmem:[#allocation2] sm:$0xff] %vm857, %v762
        %859 = vst.msk [vmem:[#allocation2 + $0x8] sm:$0xff] %vm857, %v764
        %860 = vst.msk [vmem:[#allocation2 + $0x10] sm:$0xff] %vm857, %v766
        %861 = vst.msk [vmem:[#allocation2 + $0x18] sm:$0xff] %vm857, %v768
        %862 = vst.msk [vmem:[#allocation2 + $0x20] sm:$0xff] %vm857, %v770
        %863 = vst.msk [vmem:[#allocation2 + $0x28] sm:$0xff] %vm857, %v772
        %864 = vst.msk [vmem:[#allocation2 + $0x30] sm:$0xff] %vm857, %v774
        %865 = vst.msk [vmem:[#allocation2 + $0x38] sm:$0xff] %vm857, %v776
        %866 = vst.msk [vmem:[#allocation2 + $0x40] sm:$0xff] %vm857, %v778
        %867 = vst.msk [vmem:[#allocation2 + $0x48] sm:$0xff] %vm857, %v780
        %868 = vst.msk [vmem:[#allocation2 + $0x50] sm:$0xff] %vm857, %v782
        %869 = vst.msk [vmem:[#allocation2 + $0x58] sm:$0xff] %vm857, %v784
        %870 = vst.msk [vmem:[#allocation2 + $0x60] sm:$0xff] %vm857, %v786
        %871 = vst.msk [vmem:[#allocation2 + $0x68] sm:$0xff] %vm857, %v788
        %872 = vst.msk [vmem:[#allocation2 + $0x70] sm:$0xff] %vm857, %v790
        %873 = vst.msk [vmem:[#allocation2 + $0x78] sm:$0xff] %vm857, %v792
        %874 = vst.msk [vmem:[#allocation2 + $0x80] sm:$0xff] %vm857, %v794
        %875 = vst.msk [vmem:[#allocation2 + $0x88] sm:$0xff] %vm857, %v796
        %876 = vst.msk [vmem:[#allocation2 + $0x90] sm:$0xff] %vm857, %v798
        %877 = vst.msk [vmem:[#allocation2 + $0x98] sm:$0xff] %vm857, %v800
        %878 = vst.msk [vmem:[#allocation2 + $0xa0] sm:$0xff] %vm857, %v802
        %879 = vst.msk [vmem:[#allocation2 + $0xa8] sm:$0xff] %vm857, %v804
        %880 = vst.msk [vmem:[#allocation2 + $0xb0] sm:$0xff] %vm857, %v806
        %881 = vst.msk [vmem:[#allocation2 + $0xb8] sm:$0xff] %vm857, %v808
        %882 = vst.msk [vmem:[#allocation2 + $0xc0] sm:$0xff] %vm857, %v810
        %883 = vst.msk [vmem:[#allocation2 + $0xc8] sm:$0xff] %vm857, %v812
        %884 = vst.msk [vmem:[#allocation2 + $0xd0] sm:$0xff] %vm857, %v814
        %885 = vst.msk [vmem:[#allocation2 + $0xd8] sm:$0xff] %vm857, %v816
        %886 = vst.msk [vmem:[#allocation2 + $0xe0] sm:$0xff] %vm857, %v818
        %887 = vst.msk [vmem:[#allocation2 + $0xe8] sm:$0xff] %vm857, %v820
        %888 = vst.msk [vmem:[#allocation2 + $0xf0] sm:$0xff] %vm857, %v822
        %889 = vst.msk [vmem:[#allocation2 + $0xf8] sm:$0xff] %vm857, %v824
        %891 = vrot.lane.b32.xlu0 %v237, 16
        %v892 = vpop.permute.xlu0 %891
        %893 = vrot.lane.b32.xlu0 %v238, 16
        %v894 = vpop.permute.xlu0 %893
        %895 = vrot.lane.b32.xlu0 %v239, 16
        %v896 = vpop.permute.xlu0 %895
        %897 = vrot.lane.b32.xlu0 %v240, 16
        %v898 = vpop.permute.xlu0 %897
        %899 = vrot.lane.b32.xlu0 %v241, 16
        %v900 = vpop.permute.xlu0 %899
        %901 = vrot.lane.b32.xlu0 %v242, 16
        %v902 = vpop.permute.xlu0 %901
        %903 = vrot.lane.b32.xlu0 %v243, 16
        %v904 = vpop.permute.xlu0 %903
        %905 = vrot.lane.b32.xlu0 %v244, 16
        %v906 = vpop.permute.xlu0 %905
        %907 = vrot.lane.b32.xlu0 %v245, 16
        %v908 = vpop.permute.xlu0 %907
        %909 = vrot.lane.b32.xlu0 %v246, 16
        %v910 = vpop.permute.xlu0 %909
        %911 = vrot.lane.b32.xlu0 %v247, 16
        %v912 = vpop.permute.xlu0 %911
        %913 = vrot.lane.b32.xlu0 %v248, 16
        %v914 = vpop.permute.xlu0 %913
        %915 = vrot.lane.b32.xlu0 %v249, 16
        %v916 = vpop.permute.xlu0 %915
        %917 = vrot.lane.b32.xlu0 %v250, 16
        %v918 = vpop.permute.xlu0 %917
        %919 = vrot.lane.b32.xlu0 %v251, 16
        %v920 = vpop.permute.xlu0 %919
        %921 = vrot.lane.b32.xlu0 %v252, 16
        %v922 = vpop.permute.xlu0 %921
        %923 = vrot.lane.b32.xlu0 %v253, 16
        %v924 = vpop.permute.xlu0 %923
        %925 = vrot.lane.b32.xlu0 %v254, 16
        %v926 = vpop.permute.xlu0 %925
        %927 = vrot.lane.b32.xlu0 %v255, 16
        %v928 = vpop.permute.xlu0 %927
        %929 = vrot.lane.b32.xlu0 %v256, 16
        %v930 = vpop.permute.xlu0 %929
        %931 = vrot.lane.b32.xlu0 %v257, 16
        %v932 = vpop.permute.xlu0 %931
        %933 = vrot.lane.b32.xlu0 %v258, 16
        %v934 = vpop.permute.xlu0 %933
        %935 = vrot.lane.b32.xlu0 %v259, 16
        %v936 = vpop.permute.xlu0 %935
        %937 = vrot.lane.b32.xlu0 %v260, 16
        %v938 = vpop.permute.xlu0 %937
        %939 = vrot.lane.b32.xlu0 %v261, 16
        %v940 = vpop.permute.xlu0 %939
        %941 = vrot.lane.b32.xlu0 %v262, 16
        %v942 = vpop.permute.xlu0 %941
        %943 = vrot.lane.b32.xlu0 %v263, 16
        %v944 = vpop.permute.xlu0 %943
        %945 = vrot.lane.b32.xlu0 %v264, 16
        %v946 = vpop.permute.xlu0 %945
        %947 = vrot.lane.b32.xlu0 %v265, 16
        %v948 = vpop.permute.xlu0 %947
        %949 = vrot.lane.b32.xlu0 %v266, 16
        %v950 = vpop.permute.xlu0 %949
        %951 = vrot.lane.b32.xlu0 %v267, 16
        %v952 = vpop.permute.xlu0 %951
        %953 = vrot.lane.b32.xlu0 %v268, 16
        %v954 = vpop.permute.xlu0 %953
        %955 = vrot.lane.b32.xlu0 %v269, 16
        %v956 = vpop.permute.xlu0 %955
        %957 = vrot.lane.b32.xlu0 %v270, 16
        %v958 = vpop.permute.xlu0 %957
        %959 = vrot.lane.b32.xlu0 %v271, 16
        %v960 = vpop.permute.xlu0 %959
        %961 = vrot.lane.b32.xlu0 %v272, 16
        %v962 = vpop.permute.xlu0 %961
        %963 = vrot.lane.b32.xlu0 %v273, 16
        %v964 = vpop.permute.xlu0 %963
        %965 = vrot.lane.b32.xlu0 %v274, 16
        %v966 = vpop.permute.xlu0 %965
        %967 = vrot.lane.b32.xlu0 %v275, 16
        %v968 = vpop.permute.xlu0 %967
        %969 = vrot.lane.b32.xlu0 %v276, 16
        %v970 = vpop.permute.xlu0 %969
        %971 = vrot.lane.b32.xlu0 %v277, 16
        %v972 = vpop.permute.xlu0 %971
        %973 = vrot.lane.b32.xlu0 %v278, 16
        %v974 = vpop.permute.xlu0 %973
        %975 = vrot.lane.b32.xlu0 %v279, 16
        %v976 = vpop.permute.xlu0 %975
        %977 = vrot.lane.b32.xlu0 %v280, 16
        %v978 = vpop.permute.xlu0 %977
        %979 = vrot.lane.b32.xlu0 %v281, 16
        %v980 = vpop.permute.xlu0 %979
        %981 = vrot.lane.b32.xlu0 %v282, 16
        %v982 = vpop.permute.xlu0 %981
        %983 = vrot.lane.b32.xlu0 %v283, 16
        %v984 = vpop.permute.xlu0 %983
        %985 = vrot.lane.b32.xlu0 %v284, 16
        %v986 = vpop.permute.xlu0 %985
        %vm1035 = vcmask 162945
        %1036 = vst.msk [vmem:[#allocation2 - $0x1] sm:$0xfe] %vm1035, %v892
        %vm1037 = vcmask 162944
        %1038 = vst.msk [vmem:[#allocation2 + $0x7] sm:$0xff] %vm1037, %v894
        %vm1039 = vcmask 155776
        %1040 = vst.msk [vmem:[#allocation2 + $0xf] sm:$0x1] %vm1039, %v896
        %1041 = vst.msk [vmem:[#allocation2 + $0xf] sm:$0xfe] %vm1035, %v898
        %1042 = vst.msk [vmem:[#allocation2 + $0x17] sm:$0xff] %vm1037, %v900
        %1043 = vst.msk [vmem:[#allocation2 + $0x1f] sm:$0x1] %vm1039, %v902
        %1044 = vst.msk [vmem:[#allocation2 + $0x1f] sm:$0xfe] %vm1035, %v904
        %1045 = vst.msk [vmem:[#allocation2 + $0x27] sm:$0xff] %vm1037, %v906
        %1046 = vst.msk [vmem:[#allocation2 + $0x2f] sm:$0x1] %vm1039, %v908
        %1047 = vst.msk [vmem:[#allocation2 + $0x2f] sm:$0xfe] %vm1035, %v910
        %1048 = vst.msk [vmem:[#allocation2 + $0x37] sm:$0xff] %vm1037, %v912
        %1049 = vst.msk [vmem:[#allocation2 + $0x3f] sm:$0x1] %vm1039, %v914
        %1050 = vst.msk [vmem:[#allocation2 + $0x3f] sm:$0xfe] %vm1035, %v916
        %1051 = vst.msk [vmem:[#allocation2 + $0x47] sm:$0xff] %vm1037, %v918
        %1052 = vst.msk [vmem:[#allocation2 + $0x4f] sm:$0x1] %vm1039, %v920
        %1053 = vst.msk [vmem:[#allocation2 + $0x4f] sm:$0xfe] %vm1035, %v922
        %1054 = vst.msk [vmem:[#allocation2 + $0x57] sm:$0xff] %vm1037, %v924
        %1055 = vst.msk [vmem:[#allocation2 + $0x5f] sm:$0x1] %vm1039, %v926
        %1056 = vst.msk [vmem:[#allocation2 + $0x5f] sm:$0xfe] %vm1035, %v928
        %1057 = vst.msk [vmem:[#allocation2 + $0x67] sm:$0xff] %vm1037, %v930
        %1058 = vst.msk [vmem:[#allocation2 + $0x6f] sm:$0x1] %vm1039, %v932
        %1059 = vst.msk [vmem:[#allocation2 + $0x6f] sm:$0xfe] %vm1035, %v934
        %1060 = vst.msk [vmem:[#allocation2 + $0x77] sm:$0xff] %vm1037, %v936
        %1061 = vst.msk [vmem:[#allocation2 + $0x7f] sm:$0x1] %vm1039, %v938
        %1062 = vst.msk [vmem:[#allocation2 + $0x7f] sm:$0xfe] %vm1035, %v940
        %1063 = vst.msk [vmem:[#allocation2 + $0x87] sm:$0xff] %vm1037, %v942
        %1064 = vst.msk [vmem:[#allocation2 + $0x8f] sm:$0x1] %vm1039, %v944
        %1065 = vst.msk [vmem:[#allocation2 + $0x8f] sm:$0xfe] %vm1035, %v946
        %1066 = vst.msk [vmem:[#allocation2 + $0x97] sm:$0xff] %vm1037, %v948
        %1067 = vst.msk [vmem:[#allocation2 + $0x9f] sm:$0x1] %vm1039, %v950
        %1068 = vst.msk [vmem:[#allocation2 + $0x9f] sm:$0xfe] %vm1035, %v952
        %1069 = vst.msk [vmem:[#allocation2 + $0xa7] sm:$0xff] %vm1037, %v954
        %1070 = vst.msk [vmem:[#allocation2 + $0xaf] sm:$0x1] %vm1039, %v956
        %1071 = vst.msk [vmem:[#allocation2 + $0xaf] sm:$0xfe] %vm1035, %v958
        %1072 = vst.msk [vmem:[#allocation2 + $0xb7] sm:$0xff] %vm1037, %v960
        %1073 = vst.msk [vmem:[#allocation2 + $0xbf] sm:$0x1] %vm1039, %v962
        %1074 = vst.msk [vmem:[#allocation2 + $0xbf] sm:$0xfe] %vm1035, %v964
        %1075 = vst.msk [vmem:[#allocation2 + $0xc7] sm:$0xff] %vm1037, %v966
        %1076 = vst.msk [vmem:[#allocation2 + $0xcf] sm:$0x1] %vm1039, %v968
        %1077 = vst.msk [vmem:[#allocation2 + $0xcf] sm:$0xfe] %vm1035, %v970
        %1078 = vst.msk [vmem:[#allocation2 + $0xd7] sm:$0xff] %vm1037, %v972
        %1079 = vst.msk [vmem:[#allocation2 + $0xdf] sm:$0x1] %vm1039, %v974
        %1080 = vst.msk [vmem:[#allocation2 + $0xdf] sm:$0xfe] %vm1035, %v976
        %1081 = vst.msk [vmem:[#allocation2 + $0xe7] sm:$0xff] %vm1037, %v978
        %1082 = vst.msk [vmem:[#allocation2 + $0xef] sm:$0x1] %vm1039, %v980
        %1083 = vst.msk [vmem:[#allocation2 + $0xef] sm:$0xfe] %vm1035, %v982
        %1084 = vst.msk [vmem:[#allocation2 + $0xf7] sm:$0xff] %vm1037, %v984
        %1085 = vst.msk [vmem:[#allocation2 + $0xff] sm:$0x1] %vm1039, %v986
        %1086 = vrot.lane.b32.xlu0 %v237, 20
        %v1087 = vpop.permute.xlu0 %1086
        %1088 = vrot.lane.b32.xlu0 %v238, 20
        %v1089 = vpop.permute.xlu0 %1088
        %1090 = vrot.lane.b32.xlu0 %v239, 20
        %v1091 = vpop.permute.xlu0 %1090
        %1092 = vrot.lane.b32.xlu0 %v240, 20
        %v1093 = vpop.permute.xlu0 %1092
        %1094 = vrot.lane.b32.xlu0 %v241, 20
        %v1095 = vpop.permute.xlu0 %1094
        %1096 = vrot.lane.b32.xlu0 %v242, 20
        %v1097 = vpop.permute.xlu0 %1096
        %1098 = vrot.lane.b32.xlu0 %v243, 20
        %v1099 = vpop.permute.xlu0 %1098
        %1100 = vrot.lane.b32.xlu0 %v244, 20
        %v1101 = vpop.permute.xlu0 %1100
        %1102 = vrot.lane.b32.xlu0 %v245, 20
        %v1103 = vpop.permute.xlu0 %1102
        %1104 = vrot.lane.b32.xlu0 %v246, 20
        %v1105 = vpop.permute.xlu0 %1104
        %1106 = vrot.lane.b32.xlu0 %v247, 20
        %v1107 = vpop.permute.xlu0 %1106
        %1108 = vrot.lane.b32.xlu0 %v248, 20
        %v1109 = vpop.permute.xlu0 %1108
        %1110 = vrot.lane.b32.xlu0 %v249, 20
        %v1111 = vpop.permute.xlu0 %1110
        %1112 = vrot.lane.b32.xlu0 %v250, 20
        %v1113 = vpop.permute.xlu0 %1112
        %1114 = vrot.lane.b32.xlu0 %v251, 20
        %v1115 = vpop.permute.xlu0 %1114
        %1116 = vrot.lane.b32.xlu0 %v252, 20
        %v1117 = vpop.permute.xlu0 %1116
        %1118 = vrot.lane.b32.xlu0 %v253, 20
        %v1119 = vpop.permute.xlu0 %1118
        %1120 = vrot.lane.b32.xlu0 %v254, 20
        %v1121 = vpop.permute.xlu0 %1120
        %1122 = vrot.lane.b32.xlu0 %v255, 20
        %v1123 = vpop.permute.xlu0 %1122
        %1124 = vrot.lane.b32.xlu0 %v256, 20
        %v1125 = vpop.permute.xlu0 %1124
        %1126 = vrot.lane.b32.xlu0 %v257, 20
        %v1127 = vpop.permute.xlu0 %1126
        %1128 = vrot.lane.b32.xlu0 %v258, 20
        %v1129 = vpop.permute.xlu0 %1128
        %1130 = vrot.lane.b32.xlu0 %v259, 20
        %v1131 = vpop.permute.xlu0 %1130
        %1132 = vrot.lane.b32.xlu0 %v260, 20
        %v1133 = vpop.permute.xlu0 %1132
        %1134 = vrot.lane.b32.xlu0 %v261, 20
        %v1135 = vpop.permute.xlu0 %1134
        %1136 = vrot.lane.b32.xlu0 %v262, 20
        %v1137 = vpop.permute.xlu0 %1136
        %1138 = vrot.lane.b32.xlu0 %v263, 20
        %v1139 = vpop.permute.xlu0 %1138
        %1140 = vrot.lane.b32.xlu0 %v264, 20
        %v1141 = vpop.permute.xlu0 %1140
        %1142 = vrot.lane.b32.xlu0 %v265, 20
        %v1143 = vpop.permute.xlu0 %1142
        %1144 = vrot.lane.b32.xlu0 %v266, 20
        %v1145 = vpop.permute.xlu0 %1144
        %1146 = vrot.lane.b32.xlu0 %v267, 20
        %v1147 = vpop.permute.xlu0 %1146
        %1148 = vrot.lane.b32.xlu0 %v268, 20
        %v1149 = vpop.permute.xlu0 %1148
        %1150 = vrot.lane.b32.xlu0 %v269, 20
        %v1151 = vpop.permute.xlu0 %1150
        %1152 = vrot.lane.b32.xlu0 %v270, 20
        %v1153 = vpop.permute.xlu0 %1152
        %1154 = vrot.lane.b32.xlu0 %v271, 20
        %v1155 = vpop.permute.xlu0 %1154
        %1156 = vrot.lane.b32.xlu0 %v272, 20
        %v1157 = vpop.permute.xlu0 %1156
        %1158 = vrot.lane.b32.xlu0 %v273, 20
        %v1159 = vpop.permute.xlu0 %1158
        %1160 = vrot.lane.b32.xlu0 %v274, 20
        %v1161 = vpop.permute.xlu0 %1160
        %1162 = vrot.lane.b32.xlu0 %v275, 20
        %v1163 = vpop.permute.xlu0 %1162
        %1164 = vrot.lane.b32.xlu0 %v276, 20
        %v1165 = vpop.permute.xlu0 %1164
        %1166 = vrot.lane.b32.xlu0 %v277, 20
        %v1167 = vpop.permute.xlu0 %1166
        %1168 = vrot.lane.b32.xlu0 %v278, 20
        %v1169 = vpop.permute.xlu0 %1168
        %1170 = vrot.lane.b32.xlu0 %v279, 20
        %v1171 = vpop.permute.xlu0 %1170
        %1172 = vrot.lane.b32.xlu0 %v280, 20
        %v1173 = vpop.permute.xlu0 %1172
        %1174 = vrot.lane.b32.xlu0 %v281, 20
        %v1175 = vpop.permute.xlu0 %1174
        %1176 = vrot.lane.b32.xlu0 %v282, 20
        %v1177 = vpop.permute.xlu0 %1176
        %1178 = vrot.lane.b32.xlu0 %v283, 20
        %v1179 = vpop.permute.xlu0 %1178
        %1180 = vrot.lane.b32.xlu0 %v284, 20
        %v1181 = vpop.permute.xlu0 %1180
        %vm1230 = vcmask 195746
        %1231 = vst.msk [vmem:[#allocation2 - $0x2] sm:$0xfc] %vm1230, %v1087
        %vm1232 = vcmask 195744
        %1233 = vst.msk [vmem:[#allocation2 + $0x6] sm:$0xff] %vm1232, %v1089
        %vm1234 = vcmask 189600
        %1235 = vst.msk [vmem:[#allocation2 + $0xe] sm:$0x3] %vm1234, %v1091
        %1236 = vst.msk [vmem:[#allocation2 + $0xe] sm:$0xfc] %vm1230, %v1093
        %1237 = vst.msk [vmem:[#allocation2 + $0x16] sm:$0xff] %vm1232, %v1095
        %1238 = vst.msk [vmem:[#allocation2 + $0x1e] sm:$0x3] %vm1234, %v1097
        %1239 = vst.msk [vmem:[#allocation2 + $0x1e] sm:$0xfc] %vm1230, %v1099
        %1240 = vst.msk [vmem:[#allocation2 + $0x26] sm:$0xff] %vm1232, %v1101
        %1241 = vst.msk [vmem:[#allocation2 + $0x2e] sm:$0x3] %vm1234, %v1103
        %1242 = vst.msk [vmem:[#allocation2 + $0x2e] sm:$0xfc] %vm1230, %v1105
        %1243 = vst.msk [vmem:[#allocation2 + $0x36] sm:$0xff] %vm1232, %v1107
        %1244 = vst.msk [vmem:[#allocation2 + $0x3e] sm:$0x3] %vm1234, %v1109
        %1245 = vst.msk [vmem:[#allocation2 + $0x3e] sm:$0xfc] %vm1230, %v1111
        %1246 = vst.msk [vmem:[#allocation2 + $0x46] sm:$0xff] %vm1232, %v1113
        %1247 = vst.msk [vmem:[#allocation2 + $0x4e] sm:$0x3] %vm1234, %v1115
        %1248 = vst.msk [vmem:[#allocation2 + $0x4e] sm:$0xfc] %vm1230, %v1117
        %1249 = vst.msk [vmem:[#allocation2 + $0x56] sm:$0xff] %vm1232, %v1119
        %1250 = vst.msk [vmem:[#allocation2 + $0x5e] sm:$0x3] %vm1234, %v1121
        %1251 = vst.msk [vmem:[#allocation2 + $0x5e] sm:$0xfc] %vm1230, %v1123
        %1252 = vst.msk [vmem:[#allocation2 + $0x66] sm:$0xff] %vm1232, %v1125
        %1253 = vst.msk [vmem:[#allocation2 + $0x6e] sm:$0x3] %vm1234, %v1127
        %1254 = vst.msk [vmem:[#allocation2 + $0x6e] sm:$0xfc] %vm1230, %v1129
        %1255 = vst.msk [vmem:[#allocation2 + $0x76] sm:$0xff] %vm1232, %v1131
        %1256 = vst.msk [vmem:[#allocation2 + $0x7e] sm:$0x3] %vm1234, %v1133
        %1257 = vst.msk [vmem:[#allocation2 + $0x7e] sm:$0xfc] %vm1230, %v1135
        %1258 = vst.msk [vmem:[#allocation2 + $0x86] sm:$0xff] %vm1232, %v1137
        %1259 = vst.msk [vmem:[#allocation2 + $0x8e] sm:$0x3] %vm1234, %v1139
        %1260 = vst.msk [vmem:[#allocation2 + $0x8e] sm:$0xfc] %vm1230, %v1141
        %1261 = vst.msk [vmem:[#allocation2 + $0x96] sm:$0xff] %vm1232, %v1143
        %1262 = vst.msk [vmem:[#allocation2 + $0x9e] sm:$0x3] %vm1234, %v1145
        %1263 = vst.msk [vmem:[#allocation2 + $0x9e] sm:$0xfc] %vm1230, %v1147
        %1264 = vst.msk [vmem:[#allocation2 + $0xa6] sm:$0xff] %vm1232, %v1149
        %1265 = vst.msk [vmem:[#allocation2 + $0xae] sm:$0x3] %vm1234, %v1151
        %1266 = vst.msk [vmem:[#allocation2 + $0xae] sm:$0xfc] %vm1230, %v1153
        %1267 = vst.msk [vmem:[#allocation2 + $0xb6] sm:$0xff] %vm1232, %v1155
        %1268 = vst.msk [vmem:[#allocation2 + $0xbe] sm:$0x3] %vm1234, %v1157
        %1269 = vst.msk [vmem:[#allocation2 + $0xbe] sm:$0xfc] %vm1230, %v1159
        %1270 = vst.msk [vmem:[#allocation2 + $0xc6] sm:$0xff] %vm1232, %v1161
        %1271 = vst.msk [vmem:[#allocation2 + $0xce] sm:$0x3] %vm1234, %v1163
        %1272 = vst.msk [vmem:[#allocation2 + $0xce] sm:$0xfc] %vm1230, %v1165
        %1273 = vst.msk [vmem:[#allocation2 + $0xd6] sm:$0xff] %vm1232, %v1167
        %1274 = vst.msk [vmem:[#allocation2 + $0xde] sm:$0x3] %vm1234, %v1169
        %1275 = vst.msk [vmem:[#allocation2 + $0xde] sm:$0xfc] %vm1230, %v1171
        %1276 = vst.msk [vmem:[#allocation2 + $0xe6] sm:$0xff] %vm1232, %v1173
        %1277 = vst.msk [vmem:[#allocation2 + $0xee] sm:$0x3] %vm1234, %v1175
        %1278 = vst.msk [vmem:[#allocation2 + $0xee] sm:$0xfc] %vm1230, %v1177
        %1279 = vst.msk [vmem:[#allocation2 + $0xf6] sm:$0xff] %vm1232, %v1179
        %1280 = vst.msk [vmem:[#allocation2 + $0xfe] sm:$0x3] %vm1234, %v1181
        %1283 = vrot.lane.b32.xlu0 %v240, 24
        %v1284 = vpop.permute.xlu0 %1283
        %1285 = vrot.lane.b32.xlu0 %v241, 24
        %v1286 = vpop.permute.xlu0 %1285
        %1287 = vrot.lane.b32.xlu0 %v243, 24
        %v1288 = vpop.permute.xlu0 %1287
        %1289 = vrot.lane.b32.xlu0 %v244, 24
        %v1290 = vpop.permute.xlu0 %1289
        %1291 = vrot.lane.b32.xlu0 %v246, 24
        %v1292 = vpop.permute.xlu0 %1291
        %1293 = vrot.lane.b32.xlu0 %v247, 24
        %v1294 = vpop.permute.xlu0 %1293
        %1295 = vrot.lane.b32.xlu0 %v249, 24
        %v1296 = vpop.permute.xlu0 %1295
        %1297 = vrot.lane.b32.xlu0 %v250, 24
        %v1298 = vpop.permute.xlu0 %1297
        %1299 = vrot.lane.b32.xlu0 %v252, 24
        %v1300 = vpop.permute.xlu0 %1299
        %1301 = vrot.lane.b32.xlu0 %v253, 24
        %v1302 = vpop.permute.xlu0 %1301
        %1303 = vrot.lane.b32.xlu0 %v255, 24
        %v1304 = vpop.permute.xlu0 %1303
        %1305 = vrot.lane.b32.xlu0 %v256, 24
        %v1306 = vpop.permute.xlu0 %1305
        %1307 = vrot.lane.b32.xlu0 %v258, 24
        %v1308 = vpop.permute.xlu0 %1307
        %1309 = vrot.lane.b32.xlu0 %v259, 24
        %v1310 = vpop.permute.xlu0 %1309
        %1311 = vrot.lane.b32.xlu0 %v261, 24
        %v1312 = vpop.permute.xlu0 %1311
        %1313 = vrot.lane.b32.xlu0 %v262, 24
        %v1314 = vpop.permute.xlu0 %1313
        %1315 = vrot.lane.b32.xlu0 %v264, 24
        %v1316 = vpop.permute.xlu0 %1315
        %1317 = vrot.lane.b32.xlu0 %v265, 24
        %v1318 = vpop.permute.xlu0 %1317
        %1319 = vrot.lane.b32.xlu0 %v267, 24
        %v1320 = vpop.permute.xlu0 %1319
        %1321 = vrot.lane.b32.xlu0 %v268, 24
        %v1322 = vpop.permute.xlu0 %1321
        %1323 = vrot.lane.b32.xlu0 %v270, 24
        %v1324 = vpop.permute.xlu0 %1323
        %1325 = vrot.lane.b32.xlu0 %v271, 24
        %v1326 = vpop.permute.xlu0 %1325
        %1327 = vrot.lane.b32.xlu0 %v273, 24
        %v1328 = vpop.permute.xlu0 %1327
        %1329 = vrot.lane.b32.xlu0 %v274, 24
        %v1330 = vpop.permute.xlu0 %1329
        %1331 = vrot.lane.b32.xlu0 %v276, 24
        %v1332 = vpop.permute.xlu0 %1331
        %1333 = vrot.lane.b32.xlu0 %v277, 24
        %v1334 = vpop.permute.xlu0 %1333
        %1335 = vrot.lane.b32.xlu0 %v279, 24
        %v1336 = vpop.permute.xlu0 %1335
        %1337 = vrot.lane.b32.xlu0 %v280, 24
        %v1338 = vpop.permute.xlu0 %1337
        %1339 = vrot.lane.b32.xlu0 %v282, 24
        %v1340 = vpop.permute.xlu0 %1339
        %1341 = vrot.lane.b32.xlu0 %v283, 24
        %v1342 = vpop.permute.xlu0 %1341
        %1343 = vrot.lane.b32.xlu0 %v285, 24
        %v1344 = vpop.permute.xlu0 %1343
        %1345 = vrot.lane.b32.xlu0 %v286, 24
        %v1346 = vpop.permute.xlu0 %1345
        %vm1379 = vcmask 228544
        %1380 = vst.msk [vmem:[#allocation2] sm:$0xff] %vm1379, %v1284
        %1381 = vst.msk [vmem:[#allocation2 + $0x8] sm:$0xff] %vm1379, %v1286
        %1382 = vst.msk [vmem:[#allocation2 + $0x10] sm:$0xff] %vm1379, %v1288
        %1383 = vst.msk [vmem:[#allocation2 + $0x18] sm:$0xff] %vm1379, %v1290
        %1384 = vst.msk [vmem:[#allocation2 + $0x20] sm:$0xff] %vm1379, %v1292
        %1385 = vst.msk [vmem:[#allocation2 + $0x28] sm:$0xff] %vm1379, %v1294
        %1386 = vst.msk [vmem:[#allocation2 + $0x30] sm:$0xff] %vm1379, %v1296
        %1387 = vst.msk [vmem:[#allocation2 + $0x38] sm:$0xff] %vm1379, %v1298
        %1388 = vst.msk [vmem:[#allocation2 + $0x40] sm:$0xff] %vm1379, %v1300
        %1389 = vst.msk [vmem:[#allocation2 + $0x48] sm:$0xff] %vm1379, %v1302
        %1390 = vst.msk [vmem:[#allocation2 + $0x50] sm:$0xff] %vm1379, %v1304
        %1391 = vst.msk [vmem:[#allocation2 + $0x58] sm:$0xff] %vm1379, %v1306
        %1392 = vst.msk [vmem:[#allocation2 + $0x60] sm:$0xff] %vm1379, %v1308
        %1393 = vst.msk [vmem:[#allocation2 + $0x68] sm:$0xff] %vm1379, %v1310
        %1394 = vst.msk [vmem:[#allocation2 + $0x70] sm:$0xff] %vm1379, %v1312
        %1395 = vst.msk [vmem:[#allocation2 + $0x78] sm:$0xff] %vm1379, %v1314
        %1396 = vst.msk [vmem:[#allocation2 + $0x80] sm:$0xff] %vm1379, %v1316
        %1397 = vst.msk [vmem:[#allocation2 + $0x88] sm:$0xff] %vm1379, %v1318
        %1398 = vst.msk [vmem:[#allocation2 + $0x90] sm:$0xff] %vm1379, %v1320
        %1399 = vst.msk [vmem:[#allocation2 + $0x98] sm:$0xff] %vm1379, %v1322
        %1400 = vst.msk [vmem:[#allocation2 + $0xa0] sm:$0xff] %vm1379, %v1324
        %1401 = vst.msk [vmem:[#allocation2 + $0xa8] sm:$0xff] %vm1379, %v1326
        %1402 = vst.msk [vmem:[#allocation2 + $0xb0] sm:$0xff] %vm1379, %v1328
        %1403 = vst.msk [vmem:[#allocation2 + $0xb8] sm:$0xff] %vm1379, %v1330
        %1404 = vst.msk [vmem:[#allocation2 + $0xc0] sm:$0xff] %vm1379, %v1332
        %1405 = vst.msk [vmem:[#allocation2 + $0xc8] sm:$0xff] %vm1379, %v1334
        %1406 = vst.msk [vmem:[#allocation2 + $0xd0] sm:$0xff] %vm1379, %v1336
        %1407 = vst.msk [vmem:[#allocation2 + $0xd8] sm:$0xff] %vm1379, %v1338
        %1408 = vst.msk [vmem:[#allocation2 + $0xe0] sm:$0xff] %vm1379, %v1340
        %1409 = vst.msk [vmem:[#allocation2 + $0xe8] sm:$0xff] %vm1379, %v1342
        %1410 = vst.msk [vmem:[#allocation2 + $0xf0] sm:$0xff] %vm1379, %v1344
        %1411 = vst.msk [vmem:[#allocation2 + $0xf8] sm:$0xff] %vm1379, %v1346
        %1413 = vrot.lane.b32.xlu0 %v240, 28
        %v1414 = vpop.permute.xlu0 %1413
        %1415 = vrot.lane.b32.xlu0 %v241, 28
        %v1416 = vpop.permute.xlu0 %1415
        %1417 = vrot.lane.b32.xlu0 %v242, 28
        %v1418 = vpop.permute.xlu0 %1417
        %1419 = vrot.lane.b32.xlu0 %v243, 28
        %v1420 = vpop.permute.xlu0 %1419
        %1421 = vrot.lane.b32.xlu0 %v244, 28
        %v1422 = vpop.permute.xlu0 %1421
        %1423 = vrot.lane.b32.xlu0 %v245, 28
        %v1424 = vpop.permute.xlu0 %1423
        %1425 = vrot.lane.b32.xlu0 %v246, 28
        %v1426 = vpop.permute.xlu0 %1425
        %1427 = vrot.lane.b32.xlu0 %v247, 28
        %v1428 = vpop.permute.xlu0 %1427
        %1429 = vrot.lane.b32.xlu0 %v248, 28
        %v1430 = vpop.permute.xlu0 %1429
        %1431 = vrot.lane.b32.xlu0 %v249, 28
        %v1432 = vpop.permute.xlu0 %1431
        %1433 = vrot.lane.b32.xlu0 %v250, 28
        %v1434 = vpop.permute.xlu0 %1433
        %1435 = vrot.lane.b32.xlu0 %v251, 28
        %v1436 = vpop.permute.xlu0 %1435
        %1437 = vrot.lane.b32.xlu0 %v252, 28
        %v1438 = vpop.permute.xlu0 %1437
        %1439 = vrot.lane.b32.xlu0 %v253, 28
        %v1440 = vpop.permute.xlu0 %1439
        %1441 = vrot.lane.b32.xlu0 %v254, 28
        %v1442 = vpop.permute.xlu0 %1441
        %1443 = vrot.lane.b32.xlu0 %v255, 28
        %v1444 = vpop.permute.xlu0 %1443
        %1445 = vrot.lane.b32.xlu0 %v256, 28
        %v1446 = vpop.permute.xlu0 %1445
        %1447 = vrot.lane.b32.xlu0 %v257, 28
        %v1448 = vpop.permute.xlu0 %1447
        %1449 = vrot.lane.b32.xlu0 %v258, 28
        %v1450 = vpop.permute.xlu0 %1449
        %1451 = vrot.lane.b32.xlu0 %v259, 28
        %v1452 = vpop.permute.xlu0 %1451
        %1453 = vrot.lane.b32.xlu0 %v260, 28
        %v1454 = vpop.permute.xlu0 %1453
        %1455 = vrot.lane.b32.xlu0 %v261, 28
        %v1456 = vpop.permute.xlu0 %1455
        %1457 = vrot.lane.b32.xlu0 %v262, 28
        %v1458 = vpop.permute.xlu0 %1457
        %1459 = vrot.lane.b32.xlu0 %v263, 28
        %v1460 = vpop.permute.xlu0 %1459
        %1461 = vrot.lane.b32.xlu0 %v264, 28
        %v1462 = vpop.permute.xlu0 %1461
        %1463 = vrot.lane.b32.xlu0 %v265, 28
        %v1464 = vpop.permute.xlu0 %1463
        %1465 = vrot.lane.b32.xlu0 %v266, 28
        %v1466 = vpop.permute.xlu0 %1465
        %1467 = vrot.lane.b32.xlu0 %v267, 28
        %v1468 = vpop.permute.xlu0 %1467
        %1469 = vrot.lane.b32.xlu0 %v268, 28
        %v1470 = vpop.permute.xlu0 %1469
        %1471 = vrot.lane.b32.xlu0 %v269, 28
        %v1472 = vpop.permute.xlu0 %1471
        %1473 = vrot.lane.b32.xlu0 %v270, 28
        %v1474 = vpop.permute.xlu0 %1473
        %1475 = vrot.lane.b32.xlu0 %v271, 28
        %v1476 = vpop.permute.xlu0 %1475
        %1477 = vrot.lane.b32.xlu0 %v272, 28
        %v1478 = vpop.permute.xlu0 %1477
        %1479 = vrot.lane.b32.xlu0 %v273, 28
        %v1480 = vpop.permute.xlu0 %1479
        %1481 = vrot.lane.b32.xlu0 %v274, 28
        %v1482 = vpop.permute.xlu0 %1481
        %1483 = vrot.lane.b32.xlu0 %v275, 28
        %v1484 = vpop.permute.xlu0 %1483
        %1485 = vrot.lane.b32.xlu0 %v276, 28
        %v1486 = vpop.permute.xlu0 %1485
        %1487 = vrot.lane.b32.xlu0 %v277, 28
        %v1488 = vpop.permute.xlu0 %1487
        %1489 = vrot.lane.b32.xlu0 %v278, 28
        %v1490 = vpop.permute.xlu0 %1489
        %1491 = vrot.lane.b32.xlu0 %v279, 28
        %v1492 = vpop.permute.xlu0 %1491
        %1493 = vrot.lane.b32.xlu0 %v280, 28
        %v1494 = vpop.permute.xlu0 %1493
        %1495 = vrot.lane.b32.xlu0 %v281, 28
        %v1496 = vpop.permute.xlu0 %1495
        %1497 = vrot.lane.b32.xlu0 %v282, 28
        %v1498 = vpop.permute.xlu0 %1497
        %1499 = vrot.lane.b32.xlu0 %v283, 28
        %v1500 = vpop.permute.xlu0 %1499
        %1501 = vrot.lane.b32.xlu0 %v284, 28
        %v1502 = vpop.permute.xlu0 %1501
        %1503 = vrot.lane.b32.xlu0 %v285, 28
        %v1504 = vpop.permute.xlu0 %1503
        %1505 = vrot.lane.b32.xlu0 %v286, 28
        %v1506 = vpop.permute.xlu0 %1505
        %1507 = vrot.lane.b32.xlu0 %v287, 28
        %v1508 = vpop.permute.xlu0 %1507
        %vm1557 = vcmask 261345
        %1558 = vst.msk [vmem:[#allocation2 - $0x1] sm:$0xfe] %vm1557, %v1414
        %vm1559 = vcmask 261344
        %1560 = vst.msk [vmem:[#allocation2 + $0x7] sm:$0xff] %vm1559, %v1416
        %vm1561 = vcmask 254176
        %1562 = vst.msk [vmem:[#allocation2 + $0xf] sm:$0x1] %vm1561, %v1418
        %1563 = vst.msk [vmem:[#allocation2 + $0xf] sm:$0xfe] %vm1557, %v1420
        %1564 = vst.msk [vmem:[#allocation2 + $0x17] sm:$0xff] %vm1559, %v1422
        %1565 = vst.msk [vmem:[#allocation2 + $0x1f] sm:$0x1] %vm1561, %v1424
        %1566 = vst.msk [vmem:[#allocation2 + $0x1f] sm:$0xfe] %vm1557, %v1426
        %1567 = vst.msk [vmem:[#allocation2 + $0x27] sm:$0xff] %vm1559, %v1428
        %1568 = vst.msk [vmem:[#allocation2 + $0x2f] sm:$0x1] %vm1561, %v1430
        %1569 = vst.msk [vmem:[#allocation2 + $0x2f] sm:$0xfe] %vm1557, %v1432
        %1570 = vst.msk [vmem:[#allocation2 + $0x37] sm:$0xff] %vm1559, %v1434
        %1571 = vst.msk [vmem:[#allocation2 + $0x3f] sm:$0x1] %vm1561, %v1436
        %1572 = vst.msk [vmem:[#allocation2 + $0x3f] sm:$0xfe] %vm1557, %v1438
        %1573 = vst.msk [vmem:[#allocation2 + $0x47] sm:$0xff] %vm1559, %v1440
        %1574 = vst.msk [vmem:[#allocation2 + $0x4f] sm:$0x1] %vm1561, %v1442
        %1575 = vst.msk [vmem:[#allocation2 + $0x4f] sm:$0xfe] %vm1557, %v1444
        %1576 = vst.msk [vmem:[#allocation2 + $0x57] sm:$0xff] %vm1559, %v1446
        %1577 = vst.msk [vmem:[#allocation2 + $0x5f] sm:$0x1] %vm1561, %v1448
        %1578 = vst.msk [vmem:[#allocation2 + $0x5f] sm:$0xfe] %vm1557, %v1450
        %1579 = vst.msk [vmem:[#allocation2 + $0x67] sm:$0xff] %vm1559, %v1452
        %1580 = vst.msk [vmem:[#allocation2 + $0x6f] sm:$0x1] %vm1561, %v1454
        %1581 = vst.msk [vmem:[#allocation2 + $0x6f] sm:$0xfe] %vm1557, %v1456
        %1582 = vst.msk [vmem:[#allocation2 + $0x77] sm:$0xff] %vm1559, %v1458
        %1583 = vst.msk [vmem:[#allocation2 + $0x7f] sm:$0x1] %vm1561, %v1460
        %1584 = vst.msk [vmem:[#allocation2 + $0x7f] sm:$0xfe] %vm1557, %v1462
        %1585 = vst.msk [vmem:[#allocation2 + $0x87] sm:$0xff] %vm1559, %v1464
        %1586 = vst.msk [vmem:[#allocation2 + $0x8f] sm:$0x1] %vm1561, %v1466
        %1587 = vst.msk [vmem:[#allocation2 + $0x8f] sm:$0xfe] %vm1557, %v1468
        %1588 = vst.msk [vmem:[#allocation2 + $0x97] sm:$0xff] %vm1559, %v1470
        %1589 = vst.msk [vmem:[#allocation2 + $0x9f] sm:$0x1] %vm1561, %v1472
        %1590 = vst.msk [vmem:[#allocation2 + $0x9f] sm:$0xfe] %vm1557, %v1474
        %1591 = vst.msk [vmem:[#allocation2 + $0xa7] sm:$0xff] %vm1559, %v1476
        %1592 = vst.msk [vmem:[#allocation2 + $0xaf] sm:$0x1] %vm1561, %v1478
        %1593 = vst.msk [vmem:[#allocation2 + $0xaf] sm:$0xfe] %vm1557, %v1480
        %1594 = vst.msk [vmem:[#allocation2 + $0xb7] sm:$0xff] %vm1559, %v1482
        %1595 = vst.msk [vmem:[#allocation2 + $0xbf] sm:$0x1] %vm1561, %v1484
        %1596 = vst.msk [vmem:[#allocation2 + $0xbf] sm:$0xfe] %vm1557, %v1486
        %1597 = vst.msk [vmem:[#allocation2 + $0xc7] sm:$0xff] %vm1559, %v1488
        %1598 = vst.msk [vmem:[#allocation2 + $0xcf] sm:$0x1] %vm1561, %v1490
        %1599 = vst.msk [vmem:[#allocation2 + $0xcf] sm:$0xfe] %vm1557, %v1492
        %1600 = vst.msk [vmem:[#allocation2 + $0xd7] sm:$0xff] %vm1559, %v1494
        %1601 = vst.msk [vmem:[#allocation2 + $0xdf] sm:$0x1] %vm1561, %v1496
        %1602 = vst.msk [vmem:[#allocation2 + $0xdf] sm:$0xfe] %vm1557, %v1498
        %1603 = vst.msk [vmem:[#allocation2 + $0xe7] sm:$0xff] %vm1559, %v1500
        %1604 = vst.msk [vmem:[#allocation2 + $0xef] sm:$0x1] %vm1561, %v1502
        %1605 = vst.msk [vmem:[#allocation2 + $0xef] sm:$0xfe] %vm1557, %v1504
        %1606 = vst.msk [vmem:[#allocation2 + $0xf7] sm:$0xff] %vm1559, %v1506
        %1607 = vst.msk [vmem:[#allocation2 + $0xff] sm:$0x1] %vm1561, %v1508
        %1608 = vrot.lane.b32.xlu0 %v240, 32
        %v1609 = vpop.permute.xlu0 %1608
        %1610 = vrot.lane.b32.xlu0 %v241, 32
        %v1611 = vpop.permute.xlu0 %1610
        %1612 = vrot.lane.b32.xlu0 %v242, 32
        %v1613 = vpop.permute.xlu0 %1612
        %1614 = vrot.lane.b32.xlu0 %v243, 32
        %v1615 = vpop.permute.xlu0 %1614
        %1616 = vrot.lane.b32.xlu0 %v244, 32
        %v1617 = vpop.permute.xlu0 %1616
        %1618 = vrot.lane.b32.xlu0 %v245, 32
        %v1619 = vpop.permute.xlu0 %1618
        %1620 = vrot.lane.b32.xlu0 %v246, 32
        %v1621 = vpop.permute.xlu0 %1620
        %1622 = vrot.lane.b32.xlu0 %v247, 32
        %v1623 = vpop.permute.xlu0 %1622
        %1624 = vrot.lane.b32.xlu0 %v248, 32
        %v1625 = vpop.permute.xlu0 %1624
        %1626 = vrot.lane.b32.xlu0 %v249, 32
        %v1627 = vpop.permute.xlu0 %1626
        %1628 = vrot.lane.b32.xlu0 %v250, 32
        %v1629 = vpop.permute.xlu0 %1628
        %1630 = vrot.lane.b32.xlu0 %v251, 32
        %v1631 = vpop.permute.xlu0 %1630
        %1632 = vrot.lane.b32.xlu0 %v252, 32
        %v1633 = vpop.permute.xlu0 %1632
        %1634 = vrot.lane.b32.xlu0 %v253, 32
        %v1635 = vpop.permute.xlu0 %1634
        %1636 = vrot.lane.b32.xlu0 %v254, 32
        %v1637 = vpop.permute.xlu0 %1636
        %1638 = vrot.lane.b32.xlu0 %v255, 32
        %v1639 = vpop.permute.xlu0 %1638
        %1640 = vrot.lane.b32.xlu0 %v256, 32
        %v1641 = vpop.permute.xlu0 %1640
        %1642 = vrot.lane.b32.xlu0 %v257, 32
        %v1643 = vpop.permute.xlu0 %1642
        %1644 = vrot.lane.b32.xlu0 %v258, 32
        %v1645 = vpop.permute.xlu0 %1644
        %1646 = vrot.lane.b32.xlu0 %v259, 32
        %v1647 = vpop.permute.xlu0 %1646
        %1648 = vrot.lane.b32.xlu0 %v260, 32
        %v1649 = vpop.permute.xlu0 %1648
        %1650 = vrot.lane.b32.xlu0 %v261, 32
        %v1651 = vpop.permute.xlu0 %1650
        %1652 = vrot.lane.b32.xlu0 %v262, 32
        %v1653 = vpop.permute.xlu0 %1652
        %1654 = vrot.lane.b32.xlu0 %v263, 32
        %v1655 = vpop.permute.xlu0 %1654
        %1656 = vrot.lane.b32.xlu0 %v264, 32
        %v1657 = vpop.permute.xlu0 %1656
        %1658 = vrot.lane.b32.xlu0 %v265, 32
        %v1659 = vpop.permute.xlu0 %1658
        %1660 = vrot.lane.b32.xlu0 %v266, 32
        %v1661 = vpop.permute.xlu0 %1660
        %1662 = vrot.lane.b32.xlu0 %v267, 32
        %v1663 = vpop.permute.xlu0 %1662
        %1664 = vrot.lane.b32.xlu0 %v268, 32
        %v1665 = vpop.permute.xlu0 %1664
        %1666 = vrot.lane.b32.xlu0 %v269, 32
        %v1667 = vpop.permute.xlu0 %1666
        %1668 = vrot.lane.b32.xlu0 %v270, 32
        %v1669 = vpop.permute.xlu0 %1668
        %1670 = vrot.lane.b32.xlu0 %v271, 32
        %v1671 = vpop.permute.xlu0 %1670
        %1672 = vrot.lane.b32.xlu0 %v272, 32
        %v1673 = vpop.permute.xlu0 %1672
        %1674 = vrot.lane.b32.xlu0 %v273, 32
        %v1675 = vpop.permute.xlu0 %1674
        %1676 = vrot.lane.b32.xlu0 %v274, 32
        %v1677 = vpop.permute.xlu0 %1676
        %1678 = vrot.lane.b32.xlu0 %v275, 32
        %v1679 = vpop.permute.xlu0 %1678
        %1680 = vrot.lane.b32.xlu0 %v276, 32
        %v1681 = vpop.permute.xlu0 %1680
        %1682 = vrot.lane.b32.xlu0 %v277, 32
        %v1683 = vpop.permute.xlu0 %1682
        %1684 = vrot.lane.b32.xlu0 %v278, 32
        %v1685 = vpop.permute.xlu0 %1684
        %1686 = vrot.lane.b32.xlu0 %v279, 32
        %v1687 = vpop.permute.xlu0 %1686
        %1688 = vrot.lane.b32.xlu0 %v280, 32
        %v1689 = vpop.permute.xlu0 %1688
        %1690 = vrot.lane.b32.xlu0 %v281, 32
        %v1691 = vpop.permute.xlu0 %1690
        %1692 = vrot.lane.b32.xlu0 %v282, 32
        %v1693 = vpop.permute.xlu0 %1692
        %1694 = vrot.lane.b32.xlu0 %v283, 32
        %v1695 = vpop.permute.xlu0 %1694
        %1696 = vrot.lane.b32.xlu0 %v284, 32
        %v1697 = vpop.permute.xlu0 %1696
        %1698 = vrot.lane.b32.xlu0 %v285, 32
        %v1699 = vpop.permute.xlu0 %1698
        %1700 = vrot.lane.b32.xlu0 %v286, 32
        %v1701 = vpop.permute.xlu0 %1700
        %1702 = vrot.lane.b32.xlu0 %v287, 32
        %v1703 = vpop.permute.xlu0 %1702
        %vm1752 = vcmask 294146
        %1753 = vst.msk [vmem:[#allocation2 - $0x2] sm:$0xfc] %vm1752, %v1609
        %vm1754 = vcmask 294144
        %1755 = vst.msk [vmem:[#allocation2 + $0x6] sm:$0xff] %vm1754, %v1611
        %vm1756 = vcmask 288000
        %1757 = vst.msk [vmem:[#allocation2 + $0xe] sm:$0x3] %vm1756, %v1613
        %1758 = vst.msk [vmem:[#allocation2 + $0xe] sm:$0xfc] %vm1752, %v1615
        %1759 = vst.msk [vmem:[#allocation2 + $0x16] sm:$0xff] %vm1754, %v1617
        %1760 = vst.msk [vmem:[#allocation2 + $0x1e] sm:$0x3] %vm1756, %v1619
        %1761 = vst.msk [vmem:[#allocation2 + $0x1e] sm:$0xfc] %vm1752, %v1621
        %1762 = vst.msk [vmem:[#allocation2 + $0x26] sm:$0xff] %vm1754, %v1623
        %1763 = vst.msk [vmem:[#allocation2 + $0x2e] sm:$0x3] %vm1756, %v1625
        %1764 = vst.msk [vmem:[#allocation2 + $0x2e] sm:$0xfc] %vm1752, %v1627
        %1765 = vst.msk [vmem:[#allocation2 + $0x36] sm:$0xff] %vm1754, %v1629
        %1766 = vst.msk [vmem:[#allocation2 + $0x3e] sm:$0x3] %vm1756, %v1631
        %1767 = vst.msk [vmem:[#allocation2 + $0x3e] sm:$0xfc] %vm1752, %v1633
        %1768 = vst.msk [vmem:[#allocation2 + $0x46] sm:$0xff] %vm1754, %v1635
        %1769 = vst.msk [vmem:[#allocation2 + $0x4e] sm:$0x3] %vm1756, %v1637
        %1770 = vst.msk [vmem:[#allocation2 + $0x4e] sm:$0xfc] %vm1752, %v1639
        %1771 = vst.msk [vmem:[#allocation2 + $0x56] sm:$0xff] %vm1754, %v1641
        %1772 = vst.msk [vmem:[#allocation2 + $0x5e] sm:$0x3] %vm1756, %v1643
        %1773 = vst.msk [vmem:[#allocation2 + $0x5e] sm:$0xfc] %vm1752, %v1645
        %1774 = vst.msk [vmem:[#allocation2 + $0x66] sm:$0xff] %vm1754, %v1647
        %1775 = vst.msk [vmem:[#allocation2 + $0x6e] sm:$0x3] %vm1756, %v1649
        %1776 = vst.msk [vmem:[#allocation2 + $0x6e] sm:$0xfc] %vm1752, %v1651
        %1777 = vst.msk [vmem:[#allocation2 + $0x76] sm:$0xff] %vm1754, %v1653
        %1778 = vst.msk [vmem:[#allocation2 + $0x7e] sm:$0x3] %vm1756, %v1655
        %1779 = vst.msk [vmem:[#allocation2 + $0x7e] sm:$0xfc] %vm1752, %v1657
        %1780 = vst.msk [vmem:[#allocation2 + $0x86] sm:$0xff] %vm1754, %v1659
        %1781 = vst.msk [vmem:[#allocation2 + $0x8e] sm:$0x3] %vm1756, %v1661
        %1782 = vst.msk [vmem:[#allocation2 + $0x8e] sm:$0xfc] %vm1752, %v1663
        %1783 = vst.msk [vmem:[#allocation2 + $0x96] sm:$0xff] %vm1754, %v1665
        %1784 = vst.msk [vmem:[#allocation2 + $0x9e] sm:$0x3] %vm1756, %v1667
        %1785 = vst.msk [vmem:[#allocation2 + $0x9e] sm:$0xfc] %vm1752, %v1669
        %1786 = vst.msk [vmem:[#allocation2 + $0xa6] sm:$0xff] %vm1754, %v1671
        %1787 = vst.msk [vmem:[#allocation2 + $0xae] sm:$0x3] %vm1756, %v1673
        %1788 = vst.msk [vmem:[#allocation2 + $0xae] sm:$0xfc] %vm1752, %v1675
        %1789 = vst.msk [vmem:[#allocation2 + $0xb6] sm:$0xff] %vm1754, %v1677
        %1790 = vst.msk [vmem:[#allocation2 + $0xbe] sm:$0x3] %vm1756, %v1679
        %1791 = vst.msk [vmem:[#allocation2 + $0xbe] sm:$0xfc] %vm1752, %v1681
        %1792 = vst.msk [vmem:[#allocation2 + $0xc6] sm:$0xff] %vm1754, %v1683
        %1793 = vst.msk [vmem:[#allocation2 + $0xce] sm:$0x3] %vm1756, %v1685
        %1794 = vst.msk [vmem:[#allocation2 + $0xce] sm:$0xfc] %vm1752, %v1687
        %1795 = vst.msk [vmem:[#allocation2 + $0xd6] sm:$0xff] %vm1754, %v1689
        %1796 = vst.msk [vmem:[#allocation2 + $0xde] sm:$0x3] %vm1756, %v1691
        %1797 = vst.msk [vmem:[#allocation2 + $0xde] sm:$0xfc] %vm1752, %v1693
        %1798 = vst.msk [vmem:[#allocation2 + $0xe6] sm:$0xff] %vm1754, %v1695
        %1799 = vst.msk [vmem:[#allocation2 + $0xee] sm:$0x3] %vm1756, %v1697
        %1800 = vst.msk [vmem:[#allocation2 + $0xee] sm:$0xfc] %vm1752, %v1699
        %1801 = vst.msk [vmem:[#allocation2 + $0xf6] sm:$0xff] %vm1754, %v1701
        %1802 = vst.msk [vmem:[#allocation2 + $0xfe] sm:$0x3] %vm1756, %v1703
        %v1803 = vld [vmem:[#allocation2] sm:$0xff]
        %v1804 = vld [vmem:[#allocation2 + $0x8] sm:$0xff]
        %v1805 = vld [vmem:[#allocation2 + $0x10] sm:$0xff]
        %v1806 = vld [vmem:[#allocation2 + $0x18] sm:$0xff]
        %v1807 = vld [vmem:[#allocation2 + $0x20] sm:$0xff]
        %v1808 = vld [vmem:[#allocation2 + $0x28] sm:$0xff]
        %v1809 = vld [vmem:[#allocation2 + $0x30] sm:$0xff]
        %v1810 = vld [vmem:[#allocation2 + $0x38] sm:$0xff]
        %v1811 = vld [vmem:[#allocation2 + $0x40] sm:$0xff]
        %v1812 = vld [vmem:[#allocation2 + $0x48] sm:$0xff]
        %v1813 = vld [vmem:[#allocation2 + $0x50] sm:$0xff]
        %v1814 = vld [vmem:[#allocation2 + $0x58] sm:$0xff]
        %v1815 = vld [vmem:[#allocation2 + $0x60] sm:$0xff]
        %v1816 = vld [vmem:[#allocation2 + $0x68] sm:$0xff]
        %v1817 = vld [vmem:[#allocation2 + $0x70] sm:$0xff]
        %v1818 = vld [vmem:[#allocation2 + $0x78] sm:$0xff]
        %v1819 = vld [vmem:[#allocation2 + $0x80] sm:$0xff]
        %v1820 = vld [vmem:[#allocation2 + $0x88] sm:$0xff]
        %v1821 = vld [vmem:[#allocation2 + $0x90] sm:$0xff]
        %v1822 = vld [vmem:[#allocation2 + $0x98] sm:$0xff]
        %v1823 = vld [vmem:[#allocation2 + $0xa0] sm:$0xff]
        %v1824 = vld [vmem:[#allocation2 + $0xa8] sm:$0xff]
        %v1825 = vld [vmem:[#allocation2 + $0xb0] sm:$0xff]
        %v1826 = vld [vmem:[#allocation2 + $0xb8] sm:$0xff]
        %v1827 = vld [vmem:[#allocation2 + $0xc0] sm:$0xff]
        %v1828 = vld [vmem:[#allocation2 + $0xc8] sm:$0xff]
        %v1829 = vld [vmem:[#allocation2 + $0xd0] sm:$0xff]
        %v1830 = vld [vmem:[#allocation2 + $0xd8] sm:$0xff]
        %v1831 = vld [vmem:[#allocation2 + $0xe0] sm:$0xff]
        %v1832 = vld [vmem:[#allocation2 + $0xe8] sm:$0xff]
        %v1833 = vld [vmem:[#allocation2 + $0xf0] sm:$0xff]
        %v1834 = vld [vmem:[#allocation2 + $0xf8] sm:$0xff]
        %v1835 = vld [vmem:[%s1] sm:$0xff]
        %v1836 = vld [vmem:[%s1 + $0x8] sm:$0xff]
        %v1837 = vld [vmem:[%s1 + $0x10] sm:$0xff]
        %v1838 = vld [vmem:[%s1 + $0x18] sm:$0xff]
        %v1839 = vld [vmem:[%s1 + $0x20] sm:$0xf]
        %vm1840 = vcmask 293888
        %v1842 = vsel %vm1840, %v1803, 0
        %v1845 = vsel %vm1840, %v1804, 0
        %v1848 = vsel %vm1840, %v1805, 0
        %v1851 = vsel %vm1840, %v1806, 0
        %v1854 = vsel %vm1840, %v1807, 0
        %v1857 = vsel %vm1840, %v1808, 0
        %v1860 = vsel %vm1840, %v1809, 0
        %v1863 = vsel %vm1840, %v1810, 0
        %v1866 = vsel %vm1840, %v1811, 0
        %v1869 = vsel %vm1840, %v1812, 0
        %v1872 = vsel %vm1840, %v1813, 0
        %v1875 = vsel %vm1840, %v1814, 0
        %v1878 = vsel %vm1840, %v1815, 0
        %v1881 = vsel %vm1840, %v1816, 0
        %v1884 = vsel %vm1840, %v1817, 0
        %v1887 = vsel %vm1840, %v1818, 0
        %v1890 = vsel %vm1840, %v1819, 0
        %v1893 = vsel %vm1840, %v1820, 0
        %v1896 = vsel %vm1840, %v1821, 0
        %v1899 = vsel %vm1840, %v1822, 0
        %v1902 = vsel %vm1840, %v1823, 0
        %v1905 = vsel %vm1840, %v1824, 0
        %v1908 = vsel %vm1840, %v1825, 0
        %v1911 = vsel %vm1840, %v1826, 0
        %v1914 = vsel %vm1840, %v1827, 0
        %v1917 = vsel %vm1840, %v1828, 0
        %v1920 = vsel %vm1840, %v1829, 0
        %v1923 = vsel %vm1840, %v1830, 0
        %v1926 = vsel %vm1840, %v1831, 0
        %v1929 = vsel %vm1840, %v1832, 0
        %v1932 = vsel %vm1840, %v1833, 0
        %v1935 = vsel %vm1840, %v1834, 0
        %vm1937 = vcmask 1043456
        %v1939 = vsel %vm1937, %v1839, 0
        %1941 = vmatprep.subr.mxu0 0.0
        %1942 = vmatpush1.msra.mxu0 0.0
        %1943 = vmatprep.subr.mxu0 0.0
        %1944 = vmatpush1.msra.mxu0 0.0
        %1945 = vmatprep.subr.mxu0 0.0
        %1946 = vmatpush1.msra.mxu0 0.0
        %1947 = vmatprep.subr.mxu0 0.0
        %1948 = vmatpush1.msra.mxu0 0.0
        %1949 = vmatprep.subr.mxu0 0.0
        %1950 = vmatpush1.msra.mxu0 0.0
        %1951 = vmatprep.subr.mxu0 0.0
        %1952 = vmatpush1.msra.mxu0 0.0
        %1953 = vmatprep.subr.mxu0 0.0
        %1954 = vmatpush1.msra.mxu0 0.0
        %1955 = vmatprep.subr.mxu0 0.0
        %1956 = vmatpush1.msra.mxu0 0.0
        %1957 = vmatprep.subr.mxu0 0.0
        %1958 = vmatpush1.msra.mxu0 0.0
        %1959 = vmatprep.subr.mxu0 0.0
        %1960 = vmatpush1.msra.mxu0 0.0
        %1961 = vmatprep.subr.mxu0 0.0
        %1962 = vmatpush1.msra.mxu0 0.0
        %1963 = vmatprep.subr.mxu0 0.0
        %1964 = vmatpush1.msra.mxu0 %v1939
        %1965 = vmatprep.subr.mxu0 0.0
        %1966 = vmatpush1.msra.mxu0 %v1838
        %1967 = vmatprep.subr.mxu0 0.0
        %1968 = vmatpush1.msra.mxu0 %v1837
        %1969 = vmatprep.subr.mxu0 0.0
        %1970 = vmatpush1.msra.mxu0 %v1836
        %1971 = vmatprep.subr.mxu0 0.0
        %1972 = vmatpush1.msra.mxu0 %v1835
        %1973 = vmatprep.subr.mxu0 0.0
        %1974 = vmatpush2.msra.mxu0 0.0
        %1975 = vmatprep.subr.mxu0 0.0
        %1976 = vmatpush2.msra.mxu0 0.0
        %1977 = vmatprep.subr.mxu0 0.0
        %1978 = vmatpush2.msra.mxu0 0.0
        %1979 = vmatprep.subr.mxu0 0.0
        %1980 = vmatpush2.msra.mxu0 0.0
        %1981 = vmatprep.subr.mxu0 0.0
        %1982 = vmatpush2.msra.mxu0 0.0
        %1983 = vmatprep.subr.mxu0 0.0
        %1984 = vmatpush2.msra.mxu0 0.0
        %1985 = vmatprep.subr.mxu0 0.0
        %1986 = vmatpush2.msra.mxu0 0.0
        %1987 = vmatprep.subr.mxu0 0.0
        %1988 = vmatpush2.msra.mxu0 0.0
        %1989 = vmatprep.subr.mxu0 0.0
        %1990 = vmatpush2.msra.mxu0 0.0
        %1991 = vmatprep.subr.mxu0 0.0
        %1992 = vmatpush2.msra.mxu0 0.0
        %1993 = vmatprep.subr.mxu0 0.0
        %1994 = vmatpush2.msra.mxu0 0.0
        %1995 = vmatprep.subr.mxu0 0.0
        %1996 = vmatpush2.msra.mxu0 0.0
        %1997 = vmatprep.subr.mxu0 0.0
        %1998 = vmatpush2.msra.mxu0 0.0
        %1999 = vmatprep.subr.mxu0 0.0
        %2000 = vmatpush2.msra.mxu0 0.0
        %2001 = vmatprep.subr.mxu0 0.0
        %2002 = vmatpush2.msra.mxu0 0.0
        %2003 = vmatprep.subr.mxu0 0.0
        %2004 = vmatpush2.msra.mxu0 0.0
        %2005 = vmatprep.mubr.f32.mxu0 0.0
        %2006 = vmatmul.mubr.f32.gmra.mxu0 %v1842
        %v2007 = vpop.f32.mrf.mxu0
        %v2008 = vadd.f32 0.0, %v2007
        %v2009 = vpop.f32.mrf.mxu0
        %2010 = vmatprep.mubr.f32.mxu0 0.0
        %2011 = vmatmul.mubr.f32.gmra.mxu0 %v1845
        %v2012 = vpop.f32.mrf.mxu0
        %v2013 = vadd.f32 0.0, %v2012
        %v2014 = vpop.f32.mrf.mxu0
        %2015 = vmatprep.mubr.f32.mxu0 0.0
        %2016 = vmatmul.mubr.f32.gmra.mxu0 %v1848
        %v2017 = vpop.f32.mrf.mxu0
        %v2018 = vadd.f32 0.0, %v2017
        %v2019 = vpop.f32.mrf.mxu0
        %2020 = vmatprep.mubr.f32.mxu0 0.0
        %2021 = vmatmul.mubr.f32.gmra.mxu0 %v1851
        %v2022 = vpop.f32.mrf.mxu0
        %v2023 = vadd.f32 0.0, %v2022
        %v2024 = vpop.f32.mrf.mxu0
        %2025 = vmatprep.mubr.f32.mxu0 0.0
        %2026 = vmatmul.mubr.f32.gmra.mxu0 %v1854
        %v2027 = vpop.f32.mrf.mxu0
        %v2028 = vadd.f32 0.0, %v2027
        %v2029 = vpop.f32.mrf.mxu0
        %2030 = vmatprep.mubr.f32.mxu0 0.0
        %2031 = vmatmul.mubr.f32.gmra.mxu0 %v1857
        %v2032 = vpop.f32.mrf.mxu0
        %v2033 = vadd.f32 0.0, %v2032
        %v2034 = vpop.f32.mrf.mxu0
        %2035 = vmatprep.mubr.f32.mxu0 0.0
        %2036 = vmatmul.mubr.f32.gmra.mxu0 %v1860
        %v2037 = vpop.f32.mrf.mxu0
        %v2038 = vadd.f32 0.0, %v2037
        %v2039 = vpop.f32.mrf.mxu0
        %2040 = vmatprep.mubr.f32.mxu0 0.0
        %2041 = vmatmul.mubr.f32.gmra.mxu0 %v1863
        %v2042 = vpop.f32.mrf.mxu0
        %v2043 = vadd.f32 0.0, %v2042
        %v2044 = vpop.f32.mrf.mxu0
        %2045 = vmatprep.mubr.f32.mxu0 0.0
        %2046 = vmatmul.mubr.f32.gmra.mxu0 %v1866
        %v2047 = vpop.f32.mrf.mxu0
        %v2048 = vadd.f32 0.0, %v2047
        %v2049 = vpop.f32.mrf.mxu0
        %2050 = vmatprep.mubr.f32.mxu0 0.0
        %2051 = vmatmul.mubr.f32.gmra.mxu0 %v1869
        %v2052 = vpop.f32.mrf.mxu0
        %v2053 = vadd.f32 0.0, %v2052
        %v2054 = vpop.f32.mrf.mxu0
        %2055 = vmatprep.mubr.f32.mxu0 0.0
        %2056 = vmatmul.mubr.f32.gmra.mxu0 %v1872
        %v2057 = vpop.f32.mrf.mxu0
        %v2058 = vadd.f32 0.0, %v2057
        %v2059 = vpop.f32.mrf.mxu0
        %2060 = vmatprep.mubr.f32.mxu0 0.0
        %2061 = vmatmul.mubr.f32.gmra.mxu0 %v1875
        %v2062 = vpop.f32.mrf.mxu0
        %v2063 = vadd.f32 0.0, %v2062
        %v2064 = vpop.f32.mrf.mxu0
        %2065 = vmatprep.mubr.f32.mxu0 0.0
        %2066 = vmatmul.mubr.f32.gmra.mxu0 %v1878
        %v2067 = vpop.f32.mrf.mxu0
        %v2068 = vadd.f32 0.0, %v2067
        %v2069 = vpop.f32.mrf.mxu0
        %2070 = vmatprep.mubr.f32.mxu0 0.0
        %2071 = vmatmul.mubr.f32.gmra.mxu0 %v1881
        %v2072 = vpop.f32.mrf.mxu0
        %v2073 = vadd.f32 0.0, %v2072
        %v2074 = vpop.f32.mrf.mxu0
        %2075 = vmatprep.mubr.f32.mxu0 0.0
        %2076 = vmatmul.mubr.f32.gmra.mxu0 %v1884
        %v2077 = vpop.f32.mrf.mxu0
        %v2078 = vadd.f32 0.0, %v2077
        %v2079 = vpop.f32.mrf.mxu0
        %2080 = vmatprep.mubr.f32.mxu0 0.0
        %2081 = vmatmul.mubr.f32.gmra.mxu0 %v1887
        %v2082 = vpop.f32.mrf.mxu0
        %v2083 = vadd.f32 0.0, %v2082
        %v2084 = vpop.f32.mrf.mxu0
        %2085 = vmatprep.mubr.f32.mxu0 0.0
        %2086 = vmatmul.mubr.f32.gmra.mxu0 %v1890
        %v2087 = vpop.f32.mrf.mxu0
        %v2088 = vadd.f32 0.0, %v2087
        %v2089 = vpop.f32.mrf.mxu0
        %2090 = vmatprep.mubr.f32.mxu0 0.0
        %2091 = vmatmul.mubr.f32.gmra.mxu0 %v1893
        %v2092 = vpop.f32.mrf.mxu0
        %v2093 = vadd.f32 0.0, %v2092
        %v2094 = vpop.f32.mrf.mxu0
        %2095 = vmatprep.mubr.f32.mxu0 0.0
        %2096 = vmatmul.mubr.f32.gmra.mxu0 %v1896
        %v2097 = vpop.f32.mrf.mxu0
        %v2098 = vadd.f32 0.0, %v2097
        %v2099 = vpop.f32.mrf.mxu0
        %2100 = vmatprep.mubr.f32.mxu0 0.0
        %2101 = vmatmul.mubr.f32.gmra.mxu0 %v1899
        %v2102 = vpop.f32.mrf.mxu0
        %v2103 = vadd.f32 0.0, %v2102
        %v2104 = vpop.f32.mrf.mxu0
        %2105 = vmatprep.mubr.f32.mxu0 0.0
        %2106 = vmatmul.mubr.f32.gmra.mxu0 %v1902
        %v2107 = vpop.f32.mrf.mxu0
        %v2108 = vadd.f32 0.0, %v2107
        %v2109 = vpop.f32.mrf.mxu0
        %2110 = vmatprep.mubr.f32.mxu0 0.0
        %2111 = vmatmul.mubr.f32.gmra.mxu0 %v1905
        %v2112 = vpop.f32.mrf.mxu0
        %v2113 = vadd.f32 0.0, %v2112
        %v2114 = vpop.f32.mrf.mxu0
        %2115 = vmatprep.mubr.f32.mxu0 0.0
        %2116 = vmatmul.mubr.f32.gmra.mxu0 %v1908
        %v2117 = vpop.f32.mrf.mxu0
        %v2118 = vadd.f32 0.0, %v2117
        %v2119 = vpop.f32.mrf.mxu0
        %2120 = vmatprep.mubr.f32.mxu0 0.0
        %2121 = vmatmul.mubr.f32.gmra.mxu0 %v1911
        %v2122 = vpop.f32.mrf.mxu0
        %v2123 = vadd.f32 0.0, %v2122
        %v2124 = vpop.f32.mrf.mxu0
        %2125 = vmatprep.mubr.f32.mxu0 0.0
        %2126 = vmatmul.mubr.f32.gmra.mxu0 %v1914
        %v2127 = vpop.f32.mrf.mxu0
        %v2128 = vadd.f32 0.0, %v2127
        %v2129 = vpop.f32.mrf.mxu0
        %2130 = vmatprep.mubr.f32.mxu0 0.0
        %2131 = vmatmul.mubr.f32.gmra.mxu0 %v1917
        %v2132 = vpop.f32.mrf.mxu0
        %v2133 = vadd.f32 0.0, %v2132
        %v2134 = vpop.f32.mrf.mxu0
        %2135 = vmatprep.mubr.f32.mxu0 0.0
        %2136 = vmatmul.mubr.f32.gmra.mxu0 %v1920
        %v2137 = vpop.f32.mrf.mxu0
        %v2138 = vadd.f32 0.0, %v2137
        %v2139 = vpop.f32.mrf.mxu0
        %2140 = vmatprep.mubr.f32.mxu0 0.0
        %2141 = vmatmul.mubr.f32.gmra.mxu0 %v1923
        %v2142 = vpop.f32.mrf.mxu0
        %v2143 = vadd.f32 0.0, %v2142
        %v2144 = vpop.f32.mrf.mxu0
        %2145 = vmatprep.mubr.f32.mxu0 0.0
        %2146 = vmatmul.mubr.f32.gmra.mxu0 %v1926
        %v2147 = vpop.f32.mrf.mxu0
        %v2148 = vadd.f32 0.0, %v2147
        %v2149 = vpop.f32.mrf.mxu0
        %2150 = vmatprep.mubr.f32.mxu0 0.0
        %2151 = vmatmul.mubr.f32.gmra.mxu0 %v1929
        %v2152 = vpop.f32.mrf.mxu0
        %v2153 = vadd.f32 0.0, %v2152
        %v2154 = vpop.f32.mrf.mxu0
        %2155 = vmatprep.mubr.f32.mxu0 0.0
        %2156 = vmatmul.mubr.f32.gmra.mxu0 %v1932
        %v2157 = vpop.f32.mrf.mxu0
        %v2158 = vadd.f32 0.0, %v2157
        %v2159 = vpop.f32.mrf.mxu0
        %2160 = vmatprep.mubr.f32.mxu0 0.0
        %2161 = vmatmul.mubr.f32.gmra.mxu0 %v1935
        %v2162 = vpop.f32.mrf.mxu0
        %v2163 = vadd.f32 0.0, %v2162
        %v2164 = vpop.f32.mrf.mxu0
        %2165 = vdwg.mxu0
        %v2166 = vadd.f32 %v2008, %v2013
        %v2167 = vadd.f32 %v2166, %v2018
        %v2168 = vadd.f32 %v2167, %v2023
        %v2169 = vadd.f32 %v2168, %v2028
        %v2170 = vadd.f32 %v2169, %v2033
        %v2171 = vadd.f32 %v2170, %v2038
        %v2172 = vadd.f32 %v2171, %v2043
        %v2173 = vadd.f32 %v2172, %v2048
        %v2174 = vadd.f32 %v2173, %v2053
        %v2175 = vadd.f32 %v2174, %v2058
        %v2176 = vadd.f32 %v2175, %v2063
        %v2177 = vadd.f32 %v2176, %v2068
        %v2178 = vadd.f32 %v2177, %v2073
        %v2179 = vadd.f32 %v2178, %v2078
        %v2180 = vadd.f32 %v2179, %v2083
        %v2181 = vadd.f32 %v2180, %v2088
        %v2182 = vadd.f32 %v2181, %v2093
        %v2183 = vadd.f32 %v2182, %v2098
        %v2184 = vadd.f32 %v2183, %v2103
        %v2185 = vadd.f32 %v2184, %v2108
        %v2186 = vadd.f32 %v2185, %v2113
        %v2187 = vadd.f32 %v2186, %v2118
        %v2188 = vadd.f32 %v2187, %v2123
        %v2189 = vadd.f32 %v2188, %v2128
        %v2190 = vadd.f32 %v2189, %v2133
        %v2191 = vadd.f32 %v2190, %v2138
        %v2192 = vadd.f32 %v2191, %v2143
        %v2193 = vadd.f32 %v2192, %v2148
        %v2194 = vadd.f32 %v2193, %v2153
        %v2195 = vadd.f32 %v2194, %v2158
        %v2196 = vadd.f32 %v2195, %v2163
        %v2197 = vrot.slane %v2196, 4
        %v2198 = vadd.f32 %v2196, %v2197
        %v2199 = vrot.slane %v2198, 2
        %v2200 = vadd.f32 %v2198, %v2199
        %v2201 = vrot.slane %v2200, 1
        %v2202 = vadd.f32 %v2200, %v2201
        %v2203 = vmul.f32 %v2008, %v2008
        %v2204 = vmul.f32 %v2013, %v2013
        %v2205 = vmul.f32 %v2018, %v2018
        %v2206 = vmul.f32 %v2023, %v2023
        %v2207 = vmul.f32 %v2028, %v2028
        %v2208 = vmul.f32 %v2033, %v2033
        %v2209 = vmul.f32 %v2038, %v2038
        %v2210 = vmul.f32 %v2043, %v2043
        %v2211 = vmul.f32 %v2048, %v2048
        %v2212 = vmul.f32 %v2053, %v2053
        %v2213 = vmul.f32 %v2058, %v2058
        %v2214 = vmul.f32 %v2063, %v2063
        %v2215 = vmul.f32 %v2068, %v2068
        %v2216 = vmul.f32 %v2073, %v2073
        %v2217 = vmul.f32 %v2078, %v2078
        %v2218 = vmul.f32 %v2083, %v2083
        %v2219 = vmul.f32 %v2088, %v2088
        %v2220 = vmul.f32 %v2093, %v2093
        %v2221 = vmul.f32 %v2098, %v2098
        %v2222 = vmul.f32 %v2103, %v2103
        %v2223 = vmul.f32 %v2108, %v2108
        %v2224 = vmul.f32 %v2113, %v2113
        %v2225 = vmul.f32 %v2118, %v2118
        %v2226 = vmul.f32 %v2123, %v2123
        %v2227 = vmul.f32 %v2128, %v2128
        %v2228 = vmul.f32 %v2133, %v2133
        %v2229 = vmul.f32 %v2138, %v2138
        %v2230 = vmul.f32 %v2143, %v2143
        %v2231 = vmul.f32 %v2148, %v2148
        %v2232 = vmul.f32 %v2153, %v2153
        %v2233 = vmul.f32 %v2158, %v2158
        %v2234 = vmul.f32 %v2163, %v2163
        %v2235 = vadd.f32 %v2203, %v2204
        %v2236 = vadd.f32 %v2235, %v2205
        %v2237 = vadd.f32 %v2236, %v2206
        %v2238 = vadd.f32 %v2237, %v2207
        %v2239 = vadd.f32 %v2238, %v2208
        %v2240 = vadd.f32 %v2239, %v2209
        %v2241 = vadd.f32 %v2240, %v2210
        %v2242 = vadd.f32 %v2241, %v2211
        %v2243 = vadd.f32 %v2242, %v2212
        %v2244 = vadd.f32 %v2243, %v2213
        %v2245 = vadd.f32 %v2244, %v2214
        %v2246 = vadd.f32 %v2245, %v2215
        %v2247 = vadd.f32 %v2246, %v2216
        %v2248 = vadd.f32 %v2247, %v2217
        %v2249 = vadd.f32 %v2248, %v2218
        %v2250 = vadd.f32 %v2249, %v2219
        %v2251 = vadd.f32 %v2250, %v2220
        %v2252 = vadd.f32 %v2251, %v2221
        %v2253 = vadd.f32 %v2252, %v2222
        %v2254 = vadd.f32 %v2253, %v2223
        %v2255 = vadd.f32 %v2254, %v2224
        %v2256 = vadd.f32 %v2255, %v2225
        %v2257 = vadd.f32 %v2256, %v2226
        %v2258 = vadd.f32 %v2257, %v2227
        %v2259 = vadd.f32 %v2258, %v2228
        %v2260 = vadd.f32 %v2259, %v2229
        %v2261 = vadd.f32 %v2260, %v2230
        %v2262 = vadd.f32 %v2261, %v2231
        %v2263 = vadd.f32 %v2262, %v2232
        %v2264 = vadd.f32 %v2263, %v2233
        %v2265 = vadd.f32 %v2264, %v2234
        %v2266 = vrot.slane %v2265, 4
        %v2267 = vadd.f32 %v2265, %v2266
        %v2268 = vrot.slane %v2267, 2
        %v2269 = vadd.f32 %v2267, %v2268
        %v2270 = vrot.slane %v2269, 1
        %v2271 = vadd.f32 %v2269, %v2270
        %2272 = vst [vmem:[%s167] sm:$0xff] %v2202
        %2273 = vst [vmem:[%s174] sm:$0xff] %v2271
        %s2274 = sand.u32 %s76, 1
        %s2275 = scalar_lea.sflag [#allocation4], %s2274
        %s2276 = sand.u32 %s76, 1
        %s2277 = smul.addr %s2276, 8
        %s2278 = scalar_lea.vmem [#allocation3], %s2277
        %s2279 = sand.u32 %s102, 1
        %s2280 = scalar_lea.sflag [#allocation6], %s2279
        %s2281 = sand.u32 %s102, 1
        %s2282 = smul.addr %s2281, 8
        %s2283 = scalar_lea.vmem [#allocation5], %s2282
        // Predicated region
        $region29: #{tpu_custom_call.1} parent=27 // pred_check
          %p2284 = pneg %p86
        $region30: #{tpu_custom_call.1} parent=27 // pred_check_branch
          %2286 = sbr.rel (%p2284) target = $region32
        $region31: #{tpu_custom_call.1} parent=27 // pred_region
          %s2288 = ssub.s32 128, 128
          %2289 = vsyncadd %s2275, %s2288
          %s2290 = smul.addr %s21, 128
          %s2291 = scalar_lea.hbm %s2, %s2290
          %s2293 = sshll.u32 %s2278, 4
          %s2294 = int_to_ptr.vmem [resolvable:$true] %s2293
          %2296 = dma.vmem_to_hbm [thread:$0]  %s2294, 128, %s2291, %s2275
        $region32: #{tpu_custom_call.1} parent=27 // pred_fallthru
          _
        // Predicated region
        $region33: #{tpu_custom_call.1} parent=27 // pred_check
          %p2297 = pneg %p112
        $region34: #{tpu_custom_call.1} parent=27 // pred_check_branch
          %2299 = sbr.rel (%p2297) target = $region36
        $region35: #{tpu_custom_call.1} parent=27 // pred_region
          %s2301 = ssub.s32 128, 128
          %2302 = vsyncadd %s2280, %s2301
          %s2303 = smul.addr %s21, 128
          %s2304 = scalar_lea.hbm %s3, %s2303
          %s2306 = sshll.u32 %s2283, 4
          %s2307 = int_to_ptr.vmem [resolvable:$true] %s2306
          %2309 = dma.vmem_to_hbm [thread:$0]  %s2307, 128, %s2304, %s2280
        $region36: #{tpu_custom_call.1} parent=27 // pred_fallthru
          _
      $region28: #{tpu_custom_call.1} parent=5 // pred_fallthru
        _
      %p2310 = scmp.le.s32.totalorder 2, %s16
      // Predicated region
      $region37: #{tpu_custom_call.1} parent=5 // pred_check
        %p2311 = pneg %p2310
      $region38: #{tpu_custom_call.1} parent=5 // pred_check_branch
        %2313 = sbr.rel (%p2311) target = $region40
      $region39: #{tpu_custom_call.1} parent=5 // pred_region
        %s2314 = ssub.s32 %s16, 2
        // Predicated region
        $region41: #{tpu_custom_call.1} parent=39 // pred_check
          %p2315 = pneg %p92
        $region42: #{tpu_custom_call.1} parent=39 // pred_check_branch
          %2317 = sbr.rel (%p2315) target = $region44
        $region43: #{tpu_custom_call.1} parent=39 // pred_region
          %s2318 = sand.u32 %s77, 1
          %s2319 = scalar_lea.sflag [#allocation4], %s2318
          %s2320 = sand.u32 %s77, 1
          %s2321 = smul.addr %s2320, 8
          %s2322 = scalar_lea.vmem [#allocation3], %s2321
          %2323 = dma.done %s2319, 128
        $region44: #{tpu_custom_call.1} parent=39 // pred_fallthru
          _
        // Predicated region
        $region45: #{tpu_custom_call.1} parent=39 // pred_check
          %p2324 = pneg %p118
        $region46: #{tpu_custom_call.1} parent=39 // pred_check_branch
          %2326 = sbr.rel (%p2324) target = $region48
        $region47: #{tpu_custom_call.1} parent=39 // pred_region
          %s2327 = sand.u32 %s103, 1
          %s2328 = scalar_lea.sflag [#allocation6], %s2327
          %s2329 = sand.u32 %s103, 1
          %s2330 = smul.addr %s2329, 8
          %s2331 = scalar_lea.vmem [#allocation5], %s2330
          %2332 = dma.done %s2328, 128
        $region48: #{tpu_custom_call.1} parent=39 // pred_fallthru
          _
      $region40: #{tpu_custom_call.1} parent=5 // pred_fallthru
        _
    $region6: #{tpu_custom_call.1} parent=1 // loop_footer
      %s20 = sadd.s32 1, %s16
    $region7: #{tpu_custom_call.1} parent=1 // loop_footer_branch
      %15 = sbr.rel target = $region3
    $region8: #{tpu_custom_call.1} parent=1 // loop_exit
      _
    %2333 = vsyncpa [#allocation4], 1
    %s2334 = scalar_lea.sflag [#allocation4], 1
    %2335 = vsyncpa %s2334, 1
    %2336 = vsyncpa [#allocation6], 1
    %s2337 = scalar_lea.sflag [#allocation6], 1
    %2338 = vsyncpa %s2337, 1

</llo_original>
